<compile_context>
chip_gen: v6e
topology: v6e:2x2x1
jax: 0.10.0
libtpu: 0.0.40
codegen_flags: <defaults>
</compile_context>

<pallas_src>
import functools

import jax
import jax.numpy as jnp
from jax.experimental import pallas as pl
from jax.experimental.pallas import tpu as pltpu  # noqa: F401  (kept for prod-size tiling)

LANE = 128


# ------------------------------ Pallas kernel -------------------------------

def captioner_kernel(p_ref, cw_ref, cb_ref, fcw_ref, fcb_ref,
                     emb_ref,
                     wih1_ref, whh1_ref, b1_ref,
                     wih2_ref, whh2_ref, b2_ref,
                     ww_ref, wb_ref,
                     o_ref, *, scan_len, batch, hw, inv_hw):
    """Fused image branch + 2-layer LSTM + torch.add + words head."""
    h1p = whh1_ref.shape[0]
    h2p = whh2_ref.shape[0]
    cbp = cw_ref.shape[1]

    # ---- image branch: conv3x3-as-matmul + ReLU + global average pool --------
    # One [B*HW, Kp] x [Kp, CBp] MXU matmul; per-batch loop removed.
    feat = jnp.dot(p_ref[...], cw_ref[...], preferred_element_type=jnp.float32)
    feat = jnp.maximum(feat + cb_ref[...], 0.0)                      # [B*HW, CBp] f32
    pooled = jnp.sum(feat.reshape(scan_len, hw, cbp), axis=1) * inv_hw   # [B, CBp]
    # Folded fc head (Linear -> Linear, no activation in the reference Sequential).
    img_emb = jnp.dot(pooled.astype(jnp.bfloat16), fcw_ref[...],
                      preferred_element_type=jnp.float32) + fcb_ref[...]  # [B, H2P]

    # ---- text branch (PyTorch quirk reproduced: nn.LSTM scans dim 0 = image batch,
    #      so scan_len = B and the LSTM "batch" is the caption length T) ----------
    def lstm_steps(gx, whh, hp):
        # gx: [scan_len*batch, 4*hp] = x @ w_ih + (b_ih + b_hh), hoisted into one matmul.
        outs = []
        h = c = None
        for t in range(scan_len):          # tiny static scan, fully unrolled
            g = gx[t * batch:(t + 1) * batch, :]
            if t > 0:                      # h0 = 0 -> skip the t=0 recurrent matmul (exact)
                g = g + jnp.dot(h.astype(jnp.bfloat16), whh,
                                preferred_element_type=jnp.float32)
            i = jax.nn.sigmoid(g[:, 0 * hp:1 * hp])   # 128-lane gate slabs, f32 VPU/EUP
            f = jax.nn.sigmoid(g[:, 1 * hp:2 * hp])
            gg = jnp.tanh(g[:, 2 * hp:3 * hp])
            o = jax.nn.sigmoid(g[:, 3 * hp:4 * hp])
            c = i * gg if t == 0 else f * c + i * gg   # c0 = 0 -> skip f*c at t=0 (exact)
            h = o * jnp.tanh(c)
            outs.append(h)
        return outs

    # Layer-1 / layer-2 input projections hoisted out of the recurrence.
    gx1 = jnp.dot(emb_ref[...].astype(jnp.bfloat16), wih1_ref[...],
                  preferred_element_type=jnp.float32) + b1_ref[...]
    outs1 = lstm_steps(gx1, whh1_ref[...], h1p)
    y1 = jnp.concatenate(outs1, axis=0)                 # sublane-aligned (batch = 8) chunks
    gx2 = jnp.dot(y1.astype(jnp.bfloat16), wih2_ref[...],
                  preferred_element_type=jnp.float32) + b2_ref[...]
    outs2 = lstm_steps(gx2, whh2_ref[...], h2p)

    # ---- torch.add(image_emb.unsqueeze(1).expand_as(text), text) + folded words head ----
    for t in range(scan_len):
        total = outs2[t] + img_emb[t:t + 1, :]           # broadcast add (no concat/retile)
        logits = jnp.dot(total.astype(jnp.bfloat16), ww_ref[...],
                         preferred_element_type=jnp.float32) + wb_ref[...]
        o_ref[t * batch:(t + 1) * batch, :] = logits.astype(o_ref.dtype)   # lane-dense store


def captioner_pallas(patches, emb2d, p, *, scan_len, batch, hw):
    # Everything (weights ~1 MiB + activations) fits VMEM trivially at these shapes,
    # so this is a single grid-less launch.
    # TODO(synk): at production image / vocab sizes reintroduce a spatial-reduction
    # grid (hw padded to a multiple of 128 with masked rows), do the 3x3 im2col
    # in-kernel via shifted index_maps, gather the embedding rows with
    # PrefetchScalarGridSpec, and expose a "parallel" batch axis for v7x's 2nd TC.
    rows = emb2d.shape[0]
    vp = p["words_w"].shape[1]
    return pl.pallas_call(
        functools.partial(captioner_kernel, scan_len=scan_len, batch=batch,
                          hw=hw, inv_hw=1.0 / hw),
        out_shape=jax.ShapeDtypeStruct((rows, vp), jnp.float32),
    )(patches, p["conv_w"], p["conv_b"], p["fc_w"], p["fc_b"],
      emb2d,
      p["w_ih1"], p["w_hh1"], p["b1"],
      p["w_ih2"], p["w_hh2"], p["b2"],
      p["words_w"], p["words_b"])


# ------------------------------- Parameters ---------------------------------

def _round_up(n, m=LANE):
    return ((n + m - 1) // m) * m


def _pad2d(x, rows, cols):
    return jnp.pad(x, ((0, rows - x.shape[0]), (0, cols - x.shape[1])))


def _pad_gate_cols(w, h, hp):
    # [K, 4h] -> [K, 4hp]: each PyTorch-order (i, f, g, o) gate slab zero-padded to hp lanes.
    return jnp.concatenate(
        [_pad2d(w[:, g * h:(g + 1) * h], w.shape[0], hp) for g in range(4)], axis=1)


def init_params(key, *, cin, cb, image_hid, image_embed, vocab, text_embed, hidden):
    assert image_embed == 2 * hidden, "torch.add requires image_embed_size == 2*hidden_size"
    ks = jax.random.split(key, 16)
    s = 0.05
    rnd = lambda k, shape: jax.random.normal(k, shape, jnp.float32) * s
    bf = jnp.bfloat16
    kp = _round_up(9 * cin, 32)          # im2col K padded for clean bf16 MXU tiles
    cbp = _round_up(cb)
    h1p, h2p = _round_up(hidden), _round_up(2 * hidden)
    vp = _round_up(vocab)
    h2 = 2 * hidden

    p = {}
    # TODO(synk): the pretrained ResNet-152 trunk (torch.load('resnet152-b121ed2d.pth'))
    # is replaced by a single conv3x3+ReLU + global-average-pool stand-in feeding the
    # same fc head; everything downstream of the trunk is exact.
    p["conv_w"] = _pad2d(rnd(ks[0], (9 * cin, cb)), kp, cbp).astype(bf)
    p["conv_b"] = _pad2d(rnd(ks[1], (1, cb)), 1, cbp)

    # Image fc head: Linear(feat, image_hid) -> Linear(image_hid, image_embed),
    # no activation between them -> fold in f32 at init, cast once to bf16.
    fc1_w, fc1_b = rnd(ks[2], (cb, image_hid)), rnd(ks[3], (1, image_hid))
    fc2_w, fc2_b = rnd(ks[4], (image_hid, image_embed)), rnd(ks[5], (1, image_embed))
    p["fc_w"] = _pad2d(fc1_w @ fc2_w, cbp, h2p).astype(bf)
    p["fc_b"] = _pad2d(fc1_b @ fc2_w + fc2_b, 1, h2p)

    # Text branch (LSTM weights stored transposed; bias = b_ih + b_hh combined).
    p["emb"] = rnd(ks[6], (vocab, text_embed))                                # nn.Embedding
    p["w_ih1"] = _pad_gate_cols(rnd(ks[7], (text_embed, 4 * hidden)), hidden, h1p).astype(bf)
    p["w_hh1"] = _pad_gate_cols(_pad2d(rnd(ks[8], (hidden, 4 * hidden)), h1p, 4 * hidden),
                                hidden, h1p).astype(bf)
    p["b1"] = _pad_gate_cols(rnd(ks[9], (1, 4 * hidden)), hidden, h1p)
    p["w_ih2"] = _pad_gate_cols(_pad2d(rnd(ks[10], (hidden, 4 * h2)), h1p, 4 * h2),
                                h2, h2p).astype(bf)
    p["w_hh2"] = _pad_gate_cols(_pad2d(rnd(ks[11], (h2, 4 * h2)), h2p, 4 * h2),
                                h2, h2p).astype(bf)
    p["b2"] = _pad_gate_cols(rnd(ks[12], (1, 4 * h2)), h2, h2p)

    # words head: Linear(2H, 16H) -> Linear(16H, vocab), no activation -> fold in f32.
    head1_w, head1_b = rnd(ks[13], (2 * hidden, 16 * hidden)), rnd(ks[14], (1, 16 * hidden))
    head2_w, head2_b = rnd(ks[15], (16 * hidden, vocab)), jnp.zeros((1, vocab), jnp.float32)
    p["words_w"] = _pad2d(head1_w @ head2_w, h2p, vp).astype(bf)
    p["words_b"] = _pad2d(head1_b @ head2_w + head2_b, 1, vp)
    return p


# --------------------------------- Forward ----------------------------------

def image_captioner_forward(params, image, captions, *, vocab):
    # `image` is NCHW (PyTorch convention); transpose to NHWC and im2col in JAX.
    b, cin, hh, ww = image.shape
    x = jnp.transpose(image, (0, 2, 3, 1))
    xp = jnp.pad(x, ((0, 0), (1, 1), (1, 1), (0, 0)))            # 3x3, stride 1, pad 1
    patches = jnp.concatenate(
        [xp[:, dh:dh + hh, dw:dw + ww, :] for dh in range(3) for dw in range(3)],
        axis=-1).reshape(b * hh * ww, 9 * cin)
    kp = params["conv_w"].shape[0]
    patches = jnp.pad(patches, ((0, 0), (0, kp - 9 * cin))).astype(jnp.bfloat16)  # bf16 DMA

    # nn.Dropout(0.2) is the identity in eval mode.
    emb = jnp.take(params["emb"], captions, axis=0)               # [B, T, E] (gather in JAX)
    # NOTE: the PyTorch module feeds a batch-first [B, T, E] tensor into
    # batch_first=False LSTMs, so nn.LSTM scans along dim 0 (the batch axis) and
    # treats T as its batch; that exact behaviour is reproduced in the kernel.
    scan_len, n, e = emb.shape
    emb2d = emb.reshape(scan_len * n, e)

    logits2d = captioner_pallas(patches, emb2d, params,
                                scan_len=scan_len, batch=n, hw=hh * ww)  # [B*T, vocab_padded]
    return logits2d[:, :vocab].reshape(scan_len, n, vocab)        # slice off lane padding


# ----------------------------------- Main ------------------------------------

if __name__ == "__main__":
    B, CIN, IMG = 2, 3, 16          # image: [2, 3, 16, 16] (NCHW)
    T = 8                            # caption length
    HIDDEN = 32                      # hidden_size
    IMAGE_EMBED = 2 * HIDDEN         # image_embed_size must equal 2*hidden for torch.add
    TEXT_EMBED = 32                  # text_embed_size
    VOCAB = 50                       # vocab_size
    IMAGE_HID = 48                   # image_hid_size
    CB = 64                          # synthetic backbone feature width (stand-in for 2048)

    key = jax.random.PRNGKey(0)
    k_img, k_cap, k_par = jax.random.split(key, 3)
    image = jax.random.normal(k_img, (B, CIN, IMG, IMG), jnp.float32)
    captions = jax.random.randint(k_cap, (B, T), 0, VOCAB, dtype=jnp.int32)
    params = init_params(k_par, cin=CIN, cb=CB, image_hid=IMAGE_HID,
                         image_embed=IMAGE_EMBED, vocab=VOCAB,
                         text_embed=TEXT_EMBED, hidden=HIDDEN)

    fwd = jax.jit(functools.partial(image_captioner_forward, vocab=VOCAB))
    logits = fwd(params, image, captions)
    jax.block_until_ready(logits)
    assert logits.shape == (B, T, VOCAB), logits.shape
    print("KERNEL_OK")
</pallas_src>

<mosaic_0001>
module attributes {stable_mosaic.version = 11 : i64} {
  func.func @captioner_kernel(%arg0: memref<512x32xbf16, #tpu.memory_space<vmem>>, %arg1: memref<32x128xbf16, #tpu.memory_space<vmem>>, %arg2: memref<1x128xf32, #tpu.memory_space<vmem>>, %arg3: memref<128x128xbf16, #tpu.memory_space<vmem>>, %arg4: memref<1x128xf32, #tpu.memory_space<vmem>>, %arg5: memref<16x32xf32, #tpu.memory_space<vmem>>, %arg6: memref<32x512xbf16, #tpu.memory_space<vmem>>, %arg7: memref<128x512xbf16, #tpu.memory_space<vmem>>, %arg8: memref<1x512xf32, #tpu.memory_space<vmem>>, %arg9: memref<128x512xbf16, #tpu.memory_space<vmem>>, %arg10: memref<128x512xbf16, #tpu.memory_space<vmem>>, %arg11: memref<1x512xf32, #tpu.memory_space<vmem>>, %arg12: memref<128x128xbf16, #tpu.memory_space<vmem>>, %arg13: memref<1x128xf32, #tpu.memory_space<vmem>>, %arg14: memref<16x128xf32, #tpu.memory_space<vmem>>) attributes {dimension_semantics = [], scalar_prefetch = 0 : i64, scratch_operands = 0 : i64, tpu.core_type = #tpu.core_type<tc>} {
    %c0 = arith.constant 0 : index
    %c0_0 = arith.constant 0 : index
    %0 = vector.load %arg0[%c0, %c0_0] : memref<512x32xbf16, #tpu.memory_space<vmem>>, vector<512x32xbf16>
    %c0_1 = arith.constant 0 : index
    %c0_2 = arith.constant 0 : index
    %1 = vector.load %arg1[%c0_1, %c0_2] : memref<32x128xbf16, #tpu.memory_space<vmem>>, vector<32x128xbf16>
    %cst = arith.constant dense<0.000000e+00> : vector<512x128xf32>
    %2 = tpu.matmul %0, %1, %cst {dimension_numbers = #tpu.dot_dimension_numbers<[1], [0], [0], [1], [0, 0, 1, 1], [], []>} : vector<512x32xbf16>, vector<32x128xbf16>, vector<512x128xf32> -> vector<512x128xf32>
    %c0_3 = arith.constant 0 : index
    %c0_4 = arith.constant 0 : index
    %3 = vector.load %arg2[%c0_3, %c0_4] : memref<1x128xf32, #tpu.memory_space<vmem>>, vector<1x128xf32>
    %4 = vector.broadcast %3 : vector<1x128xf32> to vector<512x128xf32>
    %5 = arith.addf %2, %4 : vector<512x128xf32>
    %cst_5 = arith.constant 0.000000e+00 : f32
    %6 = vector.broadcast %cst_5 : f32 to vector<512x128xf32>
    %7 = arith.maximumf %5, %6 : vector<512x128xf32>
    %8 = vector.shape_cast %7 : vector<512x128xf32> to vector<2x256x128xf32>
    %cst_6 = arith.constant dense<0.000000e+00> : vector<2x128xf32>
    %9 = vector.multi_reduction <add>, %8, %cst_6 [1] : vector<2x256x128xf32> to vector<2x128xf32>
    %cst_7 = arith.constant 3.906250e-03 : f32
    %10 = vector.broadcast %cst_7 : f32 to vector<2x128xf32>
    %11 = arith.mulf %9, %10 : vector<2x128xf32>
    %12 = arith.truncf %11 : vector<2x128xf32> to vector<2x128xbf16>
    %c0_8 = arith.constant 0 : index
    %c0_9 = arith.constant 0 : index
    %13 = vector.load %arg3[%c0_8, %c0_9] : memref<128x128xbf16, #tpu.memory_space<vmem>>, vector<128x128xbf16>
    %cst_10 = arith.constant dense<0.000000e+00> : vector<2x128xf32>
    %14 = tpu.matmul %12, %13, %cst_10 {dimension_numbers = #tpu.dot_dimension_numbers<[1], [0], [0], [1], [0, 0, 1, 1], [], []>} : vector<2x128xbf16>, vector<128x128xbf16>, vector<2x128xf32> -> vector<2x128xf32>
    %c0_11 = arith.constant 0 : index
    %c0_12 = arith.constant 0 : index
    %15 = vector.load %arg4[%c0_11, %c0_12] : memref<1x128xf32, #tpu.memory_space<vmem>>, vector<1x128xf32>
    %16 = vector.broadcast %15 : vector<1x128xf32> to vector<2x128xf32>
    %17 = arith.addf %14, %16 : vector<2x128xf32>
    %c0_13 = arith.constant 0 : index
    %c0_14 = arith.constant 0 : index
    %18 = vector.load %arg5[%c0_13, %c0_14] : memref<16x32xf32, #tpu.memory_space<vmem>>, vector<16x32xf32>
    %19 = arith.truncf %18 : vector<16x32xf32> to vector<16x32xbf16>
    %c0_15 = arith.constant 0 : index
    %c0_16 = arith.constant 0 : index
    %20 = vector.load %arg6[%c0_15, %c0_16] : memref<32x512xbf16, #tpu.memory_space<vmem>>, vector<32x512xbf16>
    %cst_17 = arith.constant dense<0.000000e+00> : vector<16x512xf32>
    %21 = tpu.matmul %19, %20, %cst_17 {dimension_numbers = #tpu.dot_dimension_numbers<[1], [0], [0], [1], [0, 0, 1, 1], [], []>} : vector<16x32xbf16>, vector<32x512xbf16>, vector<16x512xf32> -> vector<16x512xf32>
    %c0_18 = arith.constant 0 : index
    %c0_19 = arith.constant 0 : index
    %22 = vector.load %arg8[%c0_18, %c0_19] : memref<1x512xf32, #tpu.memory_space<vmem>>, vector<1x512xf32>
    %23 = vector.broadcast %22 : vector<1x512xf32> to vector<16x512xf32>
    %24 = arith.addf %21, %23 : vector<16x512xf32>
    %c0_20 = arith.constant 0 : index
    %c0_21 = arith.constant 0 : index
    %25 = vector.load %arg7[%c0_20, %c0_21] : memref<128x512xbf16, #tpu.memory_space<vmem>>, vector<128x512xbf16>
    %26 = vector.extract_strided_slice %24 {offsets = [0, 0], sizes = [8, 512], strides = [1, 1]} : vector<16x512xf32> to vector<8x512xf32>
    %27 = vector.extract_strided_slice %26 {offsets = [0, 0], sizes = [8, 128], strides = [1, 1]} : vector<8x512xf32> to vector<8x128xf32>
    %28 = arith.negf %27 : vector<8x128xf32>
    %29 = math.exp %28 : vector<8x128xf32>
    %cst_22 = arith.constant 1.000000e+00 : f32
    %30 = vector.broadcast %cst_22 : f32 to vector<8x128xf32>
    %31 = arith.addf %30, %29 : vector<8x128xf32>
    %32 = arith.divf %30, %31 : vector<8x128xf32>
    %33 = vector.extract_strided_slice %26 {offsets = [0, 256], sizes = [8, 128], strides = [1, 1]} : vector<8x512xf32> to vector<8x128xf32>
    %34 = math.tanh %33 : vector<8x128xf32>
    %35 = vector.extract_strided_slice %26 {offsets = [0, 384], sizes = [8, 128], strides = [1, 1]} : vector<8x512xf32> to vector<8x128xf32>
    %36 = arith.negf %35 : vector<8x128xf32>
    %37 = math.exp %36 : vector<8x128xf32>
    %cst_23 = arith.constant 1.000000e+00 : f32
    %38 = vector.broadcast %cst_23 : f32 to vector<8x128xf32>
    %39 = arith.addf %38, %37 : vector<8x128xf32>
    %40 = arith.divf %38, %39 : vector<8x128xf32>
    %41 = arith.mulf %32, %34 : vector<8x128xf32>
    %42 = math.tanh %41 : vector<8x128xf32>
    %43 = arith.mulf %40, %42 : vector<8x128xf32>
    %44 = vector.extract_strided_slice %24 {offsets = [8, 0], sizes = [8, 512], strides = [1, 1]} : vector<16x512xf32> to vector<8x512xf32>
    %45 = arith.truncf %43 : vector<8x128xf32> to vector<8x128xbf16>
    %cst_24 = arith.constant dense<0.000000e+00> : vector<8x512xf32>
    %46 = tpu.matmul %45, %25, %cst_24 {dimension_numbers = #tpu.dot_dimension_numbers<[1], [0], [0], [1], [0, 0, 1, 1], [], []>} : vector<8x128xbf16>, vector<128x512xbf16>, vector<8x512xf32> -> vector<8x512xf32>
    %47 = arith.addf %44, %46 : vector<8x512xf32>
    %48 = vector.extract_strided_slice %47 {offsets = [0, 0], sizes = [8, 128], strides = [1, 1]} : vector<8x512xf32> to vector<8x128xf32>
    %49 = arith.negf %48 : vector<8x128xf32>
    %50 = math.exp %49 : vector<8x128xf32>
    %cst_25 = arith.constant 1.000000e+00 : f32
    %51 = vector.broadcast %cst_25 : f32 to vector<8x128xf32>
    %52 = arith.addf %51, %50 : vector<8x128xf32>
    %53 = arith.divf %51, %52 : vector<8x128xf32>
    %54 = vector.extract_strided_slice %47 {offsets = [0, 128], sizes = [8, 128], strides = [1, 1]} : vector<8x512xf32> to vector<8x128xf32>
    %55 = arith.negf %54 : vector<8x128xf32>
    %56 = math.exp %55 : vector<8x128xf32>
    %cst_26 = arith.constant 1.000000e+00 : f32
    %57 = vector.broadcast %cst_26 : f32 to vector<8x128xf32>
    %58 = arith.addf %57, %56 : vector<8x128xf32>
    %59 = arith.divf %57, %58 : vector<8x128xf32>
    %60 = vector.extract_strided_slice %47 {offsets = [0, 256], sizes = [8, 128], strides = [1, 1]} : vector<8x512xf32> to vector<8x128xf32>
    %61 = math.tanh %60 : vector<8x128xf32>
    %62 = vector.extract_strided_slice %47 {offsets = [0, 384], sizes = [8, 128], strides = [1, 1]} : vector<8x512xf32> to vector<8x128xf32>
    %63 = arith.negf %62 : vector<8x128xf32>
    %64 = math.exp %63 : vector<8x128xf32>
    %cst_27 = arith.constant 1.000000e+00 : f32
    %65 = vector.broadcast %cst_27 : f32 to vector<8x128xf32>
    %66 = arith.addf %65, %64 : vector<8x128xf32>
    %67 = arith.divf %65, %66 : vector<8x128xf32>
    %68 = arith.mulf %59, %41 : vector<8x128xf32>
    %69 = arith.mulf %53, %61 : vector<8x128xf32>
    %70 = arith.addf %68, %69 : vector<8x128xf32>
    %71 = math.tanh %70 : vector<8x128xf32>
    %72 = arith.mulf %67, %71 : vector<8x128xf32>
    %73 = tpu.concatenate %43, %72 in 0 : vector<8x128xf32>, vector<8x128xf32> -> vector<16x128xf32>
    %74 = arith.truncf %73 : vector<16x128xf32> to vector<16x128xbf16>
    %c0_28 = arith.constant 0 : index
    %c0_29 = arith.constant 0 : index
    %75 = vector.load %arg9[%c0_28, %c0_29] : memref<128x512xbf16, #tpu.memory_space<vmem>>, vector<128x512xbf16>
    %cst_30 = arith.constant dense<0.000000e+00> : vector<16x512xf32>
    %76 = tpu.matmul %74, %75, %cst_30 {dimension_numbers = #tpu.dot_dimension_numbers<[1], [0], [0], [1], [0, 0, 1, 1], [], []>} : vector<16x128xbf16>, vector<128x512xbf16>, vector<16x512xf32> -> vector<16x512xf32>
    %c0_31 = arith.constant 0 : index
    %c0_32 = arith.constant 0 : index
    %77 = vector.load %arg11[%c0_31, %c0_32] : memref<1x512xf32, #tpu.memory_space<vmem>>, vector<1x512xf32>
    %78 = vector.broadcast %77 : vector<1x512xf32> to vector<16x512xf32>
    %79 = arith.addf %76, %78 : vector<16x512xf32>
    %c0_33 = arith.constant 0 : index
    %c0_34 = arith.constant 0 : index
    %80 = vector.load %arg10[%c0_33, %c0_34] : memref<128x512xbf16, #tpu.memory_space<vmem>>, vector<128x512xbf16>
    %81 = vector.extract_strided_slice %79 {offsets = [0, 0], sizes = [8, 512], strides = [1, 1]} : vector<16x512xf32> to vector<8x512xf32>
    %82 = vector.extract_strided_slice %81 {offsets = [0, 0], sizes = [8, 128], strides = [1, 1]} : vector<8x512xf32> to vector<8x128xf32>
    %83 = arith.negf %82 : vector<8x128xf32>
    %84 = math.exp %83 : vector<8x128xf32>
    %cst_35 = arith.constant 1.000000e+00 : f32
    %85 = vector.broadcast %cst_35 : f32 to vector<8x128xf32>
    %86 = arith.addf %85, %84 : vector<8x128xf32>
    %87 = arith.divf %85, %86 : vector<8x128xf32>
    %88 = vector.extract_strided_slice %81 {offsets = [0, 256], sizes = [8, 128], strides = [1, 1]} : vector<8x512xf32> to vector<8x128xf32>
    %89 = math.tanh %88 : vector<8x128xf32>
    %90 = vector.extract_strided_slice %81 {offsets = [0, 384], sizes = [8, 128], strides = [1, 1]} : vector<8x512xf32> to vector<8x128xf32>
    %91 = arith.negf %90 : vector<8x128xf32>
    %92 = math.exp %91 : vector<8x128xf32>
    %cst_36 = arith.constant 1.000000e+00 : f32
    %93 = vector.broadcast %cst_36 : f32 to vector<8x128xf32>
    %94 = arith.addf %93, %92 : vector<8x128xf32>
    %95 = arith.divf %93, %94 : vector<8x128xf32>
    %96 = arith.mulf %87, %89 : vector<8x128xf32>
    %97 = math.tanh %96 : vector<8x128xf32>
    %98 = arith.mulf %95, %97 : vector<8x128xf32>
    %99 = vector.extract_strided_slice %79 {offsets = [8, 0], sizes = [8, 512], strides = [1, 1]} : vector<16x512xf32> to vector<8x512xf32>
    %100 = arith.truncf %98 : vector<8x128xf32> to vector<8x128xbf16>
    %cst_37 = arith.constant dense<0.000000e+00> : vector<8x512xf32>
    %101 = tpu.matmul %100, %80, %cst_37 {dimension_numbers = #tpu.dot_dimension_numbers<[1], [0], [0], [1], [0, 0, 1, 1], [], []>} : vector<8x128xbf16>, vector<128x512xbf16>, vector<8x512xf32> -> vector<8x512xf32>
    %102 = arith.addf %99, %101 : vector<8x512xf32>
    %103 = vector.extract_strided_slice %102 {offsets = [0, 0], sizes = [8, 128], strides = [1, 1]} : vector<8x512xf32> to vector<8x128xf32>
    %104 = arith.negf %103 : vector<8x128xf32>
    %105 = math.exp %104 : vector<8x128xf32>
    %cst_38 = arith.constant 1.000000e+00 : f32
    %106 = vector.broadcast %cst_38 : f32 to vector<8x128xf32>
    %107 = arith.addf %106, %105 : vector<8x128xf32>
    %108 = arith.divf %106, %107 : vector<8x128xf32>
    %109 = vector.extract_strided_slice %102 {offsets = [0, 128], sizes = [8, 128], strides = [1, 1]} : vector<8x512xf32> to vector<8x128xf32>
    %110 = arith.negf %109 : vector<8x128xf32>
    %111 = math.exp %110 : vector<8x128xf32>
    %cst_39 = arith.constant 1.000000e+00 : f32
    %112 = vector.broadcast %cst_39 : f32 to vector<8x128xf32>
    %113 = arith.addf %112, %111 : vector<8x128xf32>
    %114 = arith.divf %112, %113 : vector<8x128xf32>
    %115 = vector.extract_strided_slice %102 {offsets = [0, 256], sizes = [8, 128], strides = [1, 1]} : vector<8x512xf32> to vector<8x128xf32>
    %116 = math.tanh %115 : vector<8x128xf32>
    %117 = vector.extract_strided_slice %102 {offsets = [0, 384], sizes = [8, 128], strides = [1, 1]} : vector<8x512xf32> to vector<8x128xf32>
    %118 = arith.negf %117 : vector<8x128xf32>
    %119 = math.exp %118 : vector<8x128xf32>
    %cst_40 = arith.constant 1.000000e+00 : f32
    %120 = vector.broadcast %cst_40 : f32 to vector<8x128xf32>
    %121 = arith.addf %120, %119 : vector<8x128xf32>
    %122 = arith.divf %120, %121 : vector<8x128xf32>
    %123 = arith.mulf %114, %96 : vector<8x128xf32>
    %124 = arith.mulf %108, %116 : vector<8x128xf32>
    %125 = arith.addf %123, %124 : vector<8x128xf32>
    %126 = math.tanh %125 : vector<8x128xf32>
    %127 = arith.mulf %122, %126 : vector<8x128xf32>
    %128 = vector.extract_strided_slice %17 {offsets = [0, 0], sizes = [1, 128], strides = [1, 1]} : vector<2x128xf32> to vector<1x128xf32>
    %129 = vector.broadcast %128 : vector<1x128xf32> to vector<8x128xf32>
    %130 = arith.addf %98, %129 : vector<8x128xf32>
    %131 = arith.truncf %130 : vector<8x128xf32> to vector<8x128xbf16>
    %c0_41 = arith.constant 0 : index
    %c0_42 = arith.constant 0 : index
    %132 = vector.load %arg12[%c0_41, %c0_42] : memref<128x128xbf16, #tpu.memory_space<vmem>>, vector<128x128xbf16>
    %cst_43 = arith.constant dense<0.000000e+00> : vector<8x128xf32>
    %133 = tpu.matmul %131, %132, %cst_43 {dimension_numbers = #tpu.dot_dimension_numbers<[1], [0], [0], [1], [0, 0, 1, 1], [], []>} : vector<8x128xbf16>, vector<128x128xbf16>, vector<8x128xf32> -> vector<8x128xf32>
    %c0_44 = arith.constant 0 : index
    %c0_45 = arith.constant 0 : index
    %134 = vector.load %arg13[%c0_44, %c0_45] : memref<1x128xf32, #tpu.memory_space<vmem>>, vector<1x128xf32>
    %135 = vector.broadcast %134 : vector<1x128xf32> to vector<8x128xf32>
    %136 = arith.addf %133, %135 : vector<8x128xf32>
    %c0_46 = arith.constant 0 : index
    %c0_47 = arith.constant 0 : index
    %137 = vector.load %arg14[%c0_46, %c0_47] : memref<16x128xf32, #tpu.memory_space<vmem>>, vector<8x128xf32>
    tpu.vector_store %arg14[%c0_46, %c0_47], %136 {strides = array<i32>} : memref<16x128xf32, #tpu.memory_space<vmem>>, vector<8x128xf32>,
    %138 = vector.extract_strided_slice %17 {offsets = [1, 0], sizes = [1, 128], strides = [1, 1]} : vector<2x128xf32> to vector<1x128xf32>
    %139 = vector.broadcast %138 : vector<1x128xf32> to vector<8x128xf32>
    %140 = arith.addf %127, %139 : vector<8x128xf32>
    %141 = arith.truncf %140 : vector<8x128xf32> to vector<8x128xbf16>
    %c0_48 = arith.constant 0 : index
    %c0_49 = arith.constant 0 : index
    %142 = vector.load %arg12[%c0_48, %c0_49] : memref<128x128xbf16, #tpu.memory_space<vmem>>, vector<128x128xbf16>
    %cst_50 = arith.constant dense<0.000000e+00> : vector<8x128xf32>
    %143 = tpu.matmul %141, %142, %cst_50 {dimension_numbers = #tpu.dot_dimension_numbers<[1], [0], [0], [1], [0, 0, 1, 1], [], []>} : vector<8x128xbf16>, vector<128x128xbf16>, vector<8x128xf32> -> vector<8x128xf32>
    %c0_51 = arith.constant 0 : index
    %c0_52 = arith.constant 0 : index
    %144 = vector.load %arg13[%c0_51, %c0_52] : memref<1x128xf32, #tpu.memory_space<vmem>>, vector<1x128xf32>
    %145 = vector.broadcast %144 : vector<1x128xf32> to vector<8x128xf32>
    %146 = arith.addf %143, %145 : vector<8x128xf32>
    %c8 = arith.constant 8 : index
    %c0_53 = arith.constant 0 : index
    %147 = vector.load %arg14[%c8, %c0_53] : memref<16x128xf32, #tpu.memory_space<vmem>>, vector<8x128xf32>
    tpu.vector_store %arg14[%c8, %c0_53], %146 {strides = array<i32>} : memref<16x128xf32, #tpu.memory_space<vmem>>, vector<8x128xf32>,
    return
  }
}

</mosaic_0001>

<llo_original>
// kernel: image_captioner_forward.1
$region0: #{image_captioner_forward.1}
  #allocation0 [shape = 'u32[]', space=smem, size = 0x4, offset = 0x4, fixed_abs, tag = 'smem constant byte address 0x4 - core index']
  #allocation1 [shape = 'u32[144,128]{1,0:T(1,128)}', space=vmem, size = 0x12000, scoped, tag = 'internal scratch']
  %s0 = inlined_call_operand.vmem [shape: bf16[512,32], index: 0, kind: input, shape index: {}]
  %s1 = inlined_call_operand.vmem [shape: bf16[32,128], index: 1, kind: input, shape index: {}]
  %s2 = inlined_call_operand.vmem [shape: f32[1,128], index: 2, kind: input, shape index: {}]
  %s3 = inlined_call_operand.vmem [shape: bf16[128,128], index: 3, kind: input, shape index: {}]
  %s4 = inlined_call_operand.vmem [shape: f32[1,128], index: 4, kind: input, shape index: {}]
  %s5 = inlined_call_operand.vmem [shape: f32[16,32], index: 5, kind: input, shape index: {}]
  %s6 = inlined_call_operand.vmem [shape: bf16[32,512], index: 6, kind: input, shape index: {}]
  %s7 = inlined_call_operand.vmem [shape: bf16[128,512], index: 7, kind: input, shape index: {}]
  %s8 = inlined_call_operand.vmem [shape: f32[1,512], index: 8, kind: input, shape index: {}]
  %s9 = inlined_call_operand.vmem [shape: bf16[128,512], index: 9, kind: input, shape index: {}]
  %s10 = inlined_call_operand.vmem [shape: bf16[128,512], index: 10, kind: input, shape index: {}]
  %s11 = inlined_call_operand.vmem [shape: f32[1,512], index: 11, kind: input, shape index: {}]
  %s12 = inlined_call_operand.vmem [shape: bf16[128,128], index: 12, kind: input, shape index: {}]
  %s13 = inlined_call_operand.vmem [shape: f32[1,128], index: 13, kind: input, shape index: {}]
  %s14 = inlined_call_operand.vmem [shape: f32[16,128], index: 14, kind: output, shape index: {}]
  %s15 = sld [smem:[#allocation0]]
  $region66: #{image_captioner_forward.1} parent=0
    _
  %s17 = ssub.s32 1, %s15
  %s18 = scalar_select 0, %s17, %s15
  // Predicated region
  $region2: #{image_captioner_forward.1} parent=0 // pred_check
    _
  $region3: #{image_captioner_forward.1} parent=0 // pred_check_branch
    %20 = sbr.rel (0) target = $region5
  $region4: #{image_captioner_forward.1} parent=0 // pred_region
    _
  $region5: #{image_captioner_forward.1} parent=0 // pred_fallthru
    _
  // Predicated region
  $region6: #{image_captioner_forward.1} parent=0 // pred_check
    _
  $region7: #{image_captioner_forward.1} parent=0 // pred_check_branch
    %22 = sbr.rel (0) target = $region9
  $region8: #{image_captioner_forward.1} parent=0 // pred_region
    _
  $region9: #{image_captioner_forward.1} parent=0 // pred_fallthru
    _
  // Predicated region
  $region10: #{image_captioner_forward.1} parent=0 // pred_check
    _
  $region11: #{image_captioner_forward.1} parent=0 // pred_check_branch
    %24 = sbr.rel (0) target = $region13
  $region12: #{image_captioner_forward.1} parent=0 // pred_region
    _
  $region13: #{image_captioner_forward.1} parent=0 // pred_fallthru
    _
  // Predicated region
  $region14: #{image_captioner_forward.1} parent=0 // pred_check
    _
  $region15: #{image_captioner_forward.1} parent=0 // pred_check_branch
    %26 = sbr.rel (0) target = $region17
  $region16: #{image_captioner_forward.1} parent=0 // pred_region
    _
  $region17: #{image_captioner_forward.1} parent=0 // pred_fallthru
    _
  // Predicated region
  $region18: #{image_captioner_forward.1} parent=0 // pred_check
    _
  $region19: #{image_captioner_forward.1} parent=0 // pred_check_branch
    %28 = sbr.rel (0) target = $region21
  $region20: #{image_captioner_forward.1} parent=0 // pred_region
    _
  $region21: #{image_captioner_forward.1} parent=0 // pred_fallthru
    _
  // Predicated region
  $region22: #{image_captioner_forward.1} parent=0 // pred_check
    _
  $region23: #{image_captioner_forward.1} parent=0 // pred_check_branch
    %30 = sbr.rel (0) target = $region25
  $region24: #{image_captioner_forward.1} parent=0 // pred_region
    _
  $region25: #{image_captioner_forward.1} parent=0 // pred_fallthru
    _
  // Predicated region
  $region26: #{image_captioner_forward.1} parent=0 // pred_check
    _
  $region27: #{image_captioner_forward.1} parent=0 // pred_check_branch
    %32 = sbr.rel (0) target = $region29
  $region28: #{image_captioner_forward.1} parent=0 // pred_region
    _
  $region29: #{image_captioner_forward.1} parent=0 // pred_fallthru
    _
  // Predicated region
  $region30: #{image_captioner_forward.1} parent=0 // pred_check
    _
  $region31: #{image_captioner_forward.1} parent=0 // pred_check_branch
    %34 = sbr.rel (0) target = $region33
  $region32: #{image_captioner_forward.1} parent=0 // pred_region
    _
  $region33: #{image_captioner_forward.1} parent=0 // pred_fallthru
    _
  // Predicated region
  $region34: #{image_captioner_forward.1} parent=0 // pred_check
    _
  $region35: #{image_captioner_forward.1} parent=0 // pred_check_branch
    %36 = sbr.rel (0) target = $region37
  $region36: #{image_captioner_forward.1} parent=0 // pred_region
    _
  $region37: #{image_captioner_forward.1} parent=0 // pred_fallthru
    _
  // Predicated region
  $region38: #{image_captioner_forward.1} parent=0 // pred_check
    _
  $region39: #{image_captioner_forward.1} parent=0 // pred_check_branch
    %38 = sbr.rel (0) target = $region41
  $region40: #{image_captioner_forward.1} parent=0 // pred_region
    _
  $region41: #{image_captioner_forward.1} parent=0 // pred_fallthru
    _
  // Predicated region
  $region42: #{image_captioner_forward.1} parent=0 // pred_check
    _
  $region43: #{image_captioner_forward.1} parent=0 // pred_check_branch
    %40 = sbr.rel (0) target = $region45
  $region44: #{image_captioner_forward.1} parent=0 // pred_region
    _
  $region45: #{image_captioner_forward.1} parent=0 // pred_fallthru
    _
  // Predicated region
  $region46: #{image_captioner_forward.1} parent=0 // pred_check
    _
  $region47: #{image_captioner_forward.1} parent=0 // pred_check_branch
    %42 = sbr.rel (0) target = $region49
  $region48: #{image_captioner_forward.1} parent=0 // pred_region
    _
  $region49: #{image_captioner_forward.1} parent=0 // pred_fallthru
    _
  // Predicated region
  $region50: #{image_captioner_forward.1} parent=0 // pred_check
    _
  $region51: #{image_captioner_forward.1} parent=0 // pred_check_branch
    %44 = sbr.rel (0) target = $region53
  $region52: #{image_captioner_forward.1} parent=0 // pred_region
    _
  $region53: #{image_captioner_forward.1} parent=0 // pred_fallthru
    _
  // Predicated region
  $region54: #{image_captioner_forward.1} parent=0 // pred_check
    _
  $region55: #{image_captioner_forward.1} parent=0 // pred_check_branch
    %46 = sbr.rel (0) target = $region57
  $region56: #{image_captioner_forward.1} parent=0 // pred_region
    _
  $region57: #{image_captioner_forward.1} parent=0 // pred_fallthru
    _
  %v48 = vld [vmem:[%s0] sm:$0xf]
  %v49 = vld [vmem:[%s0 + $0x4] sm:$0xf]
  %v50 = vld [vmem:[%s0 + $0x8] sm:$0xf]
  %v51 = vld [vmem:[%s0 + $0xc] sm:$0xf]
  %v52 = vld [vmem:[%s0 + $0x10] sm:$0xf]
  %v53 = vld [vmem:[%s0 + $0x14] sm:$0xf]
  %v54 = vld [vmem:[%s0 + $0x18] sm:$0xf]
  %v55 = vld [vmem:[%s0 + $0x1c] sm:$0xf]
  %v56 = vld [vmem:[%s0 + $0x20] sm:$0xf]
  %v57 = vld [vmem:[%s0 + $0x24] sm:$0xf]
  %v58 = vld [vmem:[%s0 + $0x28] sm:$0xf]
  %v59 = vld [vmem:[%s0 + $0x2c] sm:$0xf]
  %v60 = vld [vmem:[%s0 + $0x30] sm:$0xf]
  %v61 = vld [vmem:[%s0 + $0x34] sm:$0xf]
  %v62 = vld [vmem:[%s0 + $0x38] sm:$0xf]
  %v63 = vld [vmem:[%s0 + $0x3c] sm:$0xf]
  %v64 = vld [vmem:[%s0 + $0x40] sm:$0xf]
  %v65 = vld [vmem:[%s0 + $0x44] sm:$0xf]
  %v66 = vld [vmem:[%s0 + $0x48] sm:$0xf]
  %v67 = vld [vmem:[%s0 + $0x4c] sm:$0xf]
  %v68 = vld [vmem:[%s0 + $0x50] sm:$0xf]
  %v69 = vld [vmem:[%s0 + $0x54] sm:$0xf]
  %v70 = vld [vmem:[%s0 + $0x58] sm:$0xf]
  %v71 = vld [vmem:[%s0 + $0x5c] sm:$0xf]
  %v72 = vld [vmem:[%s0 + $0x60] sm:$0xf]
  %v73 = vld [vmem:[%s0 + $0x64] sm:$0xf]
  %v74 = vld [vmem:[%s0 + $0x68] sm:$0xf]
  %v75 = vld [vmem:[%s0 + $0x6c] sm:$0xf]
  %v76 = vld [vmem:[%s0 + $0x70] sm:$0xf]
  %v77 = vld [vmem:[%s0 + $0x74] sm:$0xf]
  %v78 = vld [vmem:[%s0 + $0x78] sm:$0xf]
  %v79 = vld [vmem:[%s0 + $0x7c] sm:$0xf]
  %v80 = vld [vmem:[%s0 + $0x80] sm:$0xf]
  %v81 = vld [vmem:[%s0 + $0x84] sm:$0xf]
  %v82 = vld [vmem:[%s0 + $0x88] sm:$0xf]
  %v83 = vld [vmem:[%s0 + $0x8c] sm:$0xf]
  %v84 = vld [vmem:[%s0 + $0x90] sm:$0xf]
  %v85 = vld [vmem:[%s0 + $0x94] sm:$0xf]
  %v86 = vld [vmem:[%s0 + $0x98] sm:$0xf]
  %v87 = vld [vmem:[%s0 + $0x9c] sm:$0xf]
  %v88 = vld [vmem:[%s0 + $0xa0] sm:$0xf]
  %v89 = vld [vmem:[%s0 + $0xa4] sm:$0xf]
  %v90 = vld [vmem:[%s0 + $0xa8] sm:$0xf]
  %v91 = vld [vmem:[%s0 + $0xac] sm:$0xf]
  %v92 = vld [vmem:[%s0 + $0xb0] sm:$0xf]
  %v93 = vld [vmem:[%s0 + $0xb4] sm:$0xf]
  %v94 = vld [vmem:[%s0 + $0xb8] sm:$0xf]
  %v95 = vld [vmem:[%s0 + $0xbc] sm:$0xf]
  %v96 = vld [vmem:[%s0 + $0xc0] sm:$0xf]
  %v97 = vld [vmem:[%s0 + $0xc4] sm:$0xf]
  %v98 = vld [vmem:[%s0 + $0xc8] sm:$0xf]
  %v99 = vld [vmem:[%s0 + $0xcc] sm:$0xf]
  %v100 = vld [vmem:[%s0 + $0xd0] sm:$0xf]
  %v101 = vld [vmem:[%s0 + $0xd4] sm:$0xf]
  %v102 = vld [vmem:[%s0 + $0xd8] sm:$0xf]
  %v103 = vld [vmem:[%s0 + $0xdc] sm:$0xf]
  %v104 = vld [vmem:[%s0 + $0xe0] sm:$0xf]
  %v105 = vld [vmem:[%s0 + $0xe4] sm:$0xf]
  %v106 = vld [vmem:[%s0 + $0xe8] sm:$0xf]
  %v107 = vld [vmem:[%s0 + $0xec] sm:$0xf]
  %v108 = vld [vmem:[%s0 + $0xf0] sm:$0xf]
  %v109 = vld [vmem:[%s0 + $0xf4] sm:$0xf]
  %v110 = vld [vmem:[%s0 + $0xf8] sm:$0xf]
  %v111 = vld [vmem:[%s0 + $0xfc] sm:$0xf]
  %v112 = vld [vmem:[%s1] sm:$0xf]
  %v113 = vld [vmem:[%s1 + $0x4] sm:$0xf]
  %v114 = vld [vmem:[%s1 + $0x8] sm:$0xf]
  %v115 = vld [vmem:[%s1 + $0xc] sm:$0xf]
  %v116 = vld [vmem:[%s2] sm:$0x1]
  %v118 = vlaneseq
  %v119 = vshrl.u32 %v118, 7
  %v120 = vsub.s32 0, %v119
  %v121 = vrot.slane %v116, %v120
  %v187 = vunpack.c.l.b16 %v48
  %v188 = vunpack.c.l.b16 %v49
  %v189 = vunpack.c.l.b16 %v50
  %v190 = vunpack.c.l.b16 %v51
  %v191 = vunpack.c.l.b16 %v52
  %v192 = vunpack.c.l.b16 %v53
  %v193 = vunpack.c.l.b16 %v54
  %v194 = vunpack.c.l.b16 %v55
  %v195 = vunpack.c.l.b16 %v56
  %v196 = vunpack.c.l.b16 %v57
  %v197 = vunpack.c.l.b16 %v58
  %v198 = vunpack.c.l.b16 %v59
  %v199 = vunpack.c.l.b16 %v60
  %v200 = vunpack.c.l.b16 %v61
  %v201 = vunpack.c.l.b16 %v62
  %v202 = vunpack.c.l.b16 %v63
  %v203 = vunpack.c.l.b16 %v64
  %v204 = vunpack.c.l.b16 %v65
  %v205 = vunpack.c.l.b16 %v66
  %v206 = vunpack.c.l.b16 %v67
  %v207 = vunpack.c.l.b16 %v68
  %v208 = vunpack.c.l.b16 %v69
  %v209 = vunpack.c.l.b16 %v70
  %v210 = vunpack.c.l.b16 %v71
  %v211 = vunpack.c.l.b16 %v72
  %v212 = vunpack.c.l.b16 %v73
  %v213 = vunpack.c.l.b16 %v74
  %v214 = vunpack.c.l.b16 %v75
  %v215 = vunpack.c.l.b16 %v76
  %v216 = vunpack.c.l.b16 %v77
  %v217 = vunpack.c.l.b16 %v78
  %v218 = vunpack.c.l.b16 %v79
  %v219 = vunpack.c.l.b16 %v80
  %v220 = vunpack.c.l.b16 %v81
  %v221 = vunpack.c.l.b16 %v82
  %v222 = vunpack.c.l.b16 %v83
  %v223 = vunpack.c.l.b16 %v84
  %v224 = vunpack.c.l.b16 %v85
  %v225 = vunpack.c.l.b16 %v86
  %v226 = vunpack.c.l.b16 %v87
  %v227 = vunpack.c.l.b16 %v88
  %v228 = vunpack.c.l.b16 %v89
  %v229 = vunpack.c.l.b16 %v90
  %v230 = vunpack.c.l.b16 %v91
  %v231 = vunpack.c.l.b16 %v92
  %v232 = vunpack.c.l.b16 %v93
  %v233 = vunpack.c.l.b16 %v94
  %v234 = vunpack.c.l.b16 %v95
  %v235 = vunpack.c.l.b16 %v96
  %v236 = vunpack.c.l.b16 %v97
  %v237 = vunpack.c.l.b16 %v98
  %v238 = vunpack.c.l.b16 %v99
  %v239 = vunpack.c.l.b16 %v100
  %v240 = vunpack.c.l.b16 %v101
  %v241 = vunpack.c.l.b16 %v102
  %v242 = vunpack.c.l.b16 %v103
  %v243 = vunpack.c.l.b16 %v104
  %v244 = vunpack.c.l.b16 %v105
  %v245 = vunpack.c.l.b16 %v106
  %v246 = vunpack.c.l.b16 %v107
  %v247 = vunpack.c.l.b16 %v108
  %v248 = vunpack.c.l.b16 %v109
  %v249 = vunpack.c.l.b16 %v110
  %v250 = vunpack.c.l.b16 %v111
  %v251 = vpack.c.b16 %v188, %v187
  %v252 = vpack.c.b16 %v190, %v189
  %v253 = vpack.c.b16 %v192, %v191
  %v254 = vpack.c.b16 %v194, %v193
  %v255 = vpack.c.b16 %v196, %v195
  %v256 = vpack.c.b16 %v198, %v197
  %v257 = vpack.c.b16 %v200, %v199
  %v258 = vpack.c.b16 %v202, %v201
  %v259 = vpack.c.b16 %v204, %v203
  %v260 = vpack.c.b16 %v206, %v205
  %v261 = vpack.c.b16 %v208, %v207
  %v262 = vpack.c.b16 %v210, %v209
  %v263 = vpack.c.b16 %v212, %v211
  %v264 = vpack.c.b16 %v214, %v213
  %v265 = vpack.c.b16 %v216, %v215
  %v266 = vpack.c.b16 %v218, %v217
  %v267 = vpack.c.b16 %v220, %v219
  %v268 = vpack.c.b16 %v222, %v221
  %v269 = vpack.c.b16 %v224, %v223
  %v270 = vpack.c.b16 %v226, %v225
  %v271 = vpack.c.b16 %v228, %v227
  %v272 = vpack.c.b16 %v230, %v229
  %v273 = vpack.c.b16 %v232, %v231
  %v274 = vpack.c.b16 %v234, %v233
  %v275 = vpack.c.b16 %v236, %v235
  %v276 = vpack.c.b16 %v238, %v237
  %v277 = vpack.c.b16 %v240, %v239
  %v278 = vpack.c.b16 %v242, %v241
  %v279 = vpack.c.b16 %v244, %v243
  %v280 = vpack.c.b16 %v246, %v245
  %v281 = vpack.c.b16 %v248, %v247
  %v282 = vpack.c.b16 %v250, %v249
  %v287 = vunpack.c.l.b16 %v112
  %v288 = vunpack.c.l.b16 %v113
  %v289 = vunpack.c.l.b16 %v114
  %v290 = vunpack.c.l.b16 %v115
  %v291 = vpack.c.b16 %v288, %v287
  %v292 = vpack.c.b16 %v290, %v289
  %vm295 = vcmask 261120
  %v297 = vsel %vm295, %v251, 0
  %v300 = vsel %vm295, %v252, 0
  %v303 = vsel %vm295, %v253, 0
  %v306 = vsel %vm295, %v254, 0
  %v309 = vsel %vm295, %v255, 0
  %v312 = vsel %vm295, %v256, 0
  %v315 = vsel %vm295, %v257, 0
  %v318 = vsel %vm295, %v258, 0
  %v321 = vsel %vm295, %v259, 0
  %v324 = vsel %vm295, %v260, 0
  %v327 = vsel %vm295, %v261, 0
  %v330 = vsel %vm295, %v262, 0
  %v333 = vsel %vm295, %v263, 0
  %v336 = vsel %vm295, %v264, 0
  %v339 = vsel %vm295, %v265, 0
  %v342 = vsel %vm295, %v266, 0
  %v345 = vsel %vm295, %v267, 0
  %v348 = vsel %vm295, %v268, 0
  %v351 = vsel %vm295, %v269, 0
  %v354 = vsel %vm295, %v270, 0
  %v357 = vsel %vm295, %v271, 0
  %v360 = vsel %vm295, %v272, 0
  %v363 = vsel %vm295, %v273, 0
  %v366 = vsel %vm295, %v274, 0
  %v369 = vsel %vm295, %v275, 0
  %v372 = vsel %vm295, %v276, 0
  %v375 = vsel %vm295, %v277, 0
  %v378 = vsel %vm295, %v278, 0
  %v381 = vsel %vm295, %v279, 0
  %v384 = vsel %vm295, %v280, 0
  %v387 = vsel %vm295, %v281, 0
  %v390 = vsel %vm295, %v282, 0
  %392 = vmatprep.subr.bf16.mxu0 0
  %393 = vmatpush1.bf16.msra.mxu0 0
  %394 = vmatprep.subr.bf16.mxu0 0
  %395 = vmatpush1.bf16.msra.mxu0 0
  %396 = vmatprep.subr.bf16.mxu0 0
  %397 = vmatpush1.bf16.msra.mxu0 0
  %398 = vmatprep.subr.bf16.mxu0 0
  %399 = vmatpush1.bf16.msra.mxu0 0
  %400 = vmatprep.subr.bf16.mxu0 0
  %401 = vmatpush1.bf16.msra.mxu0 0
  %402 = vmatprep.subr.bf16.mxu0 0
  %403 = vmatpush1.bf16.msra.mxu0 0
  %404 = vmatprep.subr.bf16.mxu0 0
  %405 = vmatpush1.bf16.msra.mxu0 %v292
  %406 = vmatprep.subr.bf16.mxu0 0
  %407 = vmatpush1.bf16.msra.mxu0 %v291
  %408 = vmatprep.subr.bf16.mxu0 0
  %409 = vmatpush2.bf16.msra.mxu0 0
  %410 = vmatprep.subr.bf16.mxu0 0
  %411 = vmatpush2.bf16.msra.mxu0 0
  %412 = vmatprep.subr.bf16.mxu0 0
  %413 = vmatpush2.bf16.msra.mxu0 0
  %414 = vmatprep.subr.bf16.mxu0 0
  %415 = vmatpush2.bf16.msra.mxu0 0
  %416 = vmatprep.subr.bf16.mxu0 0
  %417 = vmatpush2.bf16.msra.mxu0 0
  %418 = vmatprep.subr.bf16.mxu0 0
  %419 = vmatpush2.bf16.msra.mxu0 0
  %420 = vmatprep.subr.bf16.mxu0 0
  %421 = vmatpush2.bf16.msra.mxu0 0
  %422 = vmatprep.subr.bf16.mxu0 0
  %423 = vmatpush2.bf16.msra.mxu0 0
  %424 = vmatprep.mubr.bf16.mxu0 0
  %425 = vmatmul.mubr.bf16.gmra.mxu0 %v297
  %v426 = vpop.f32.mrf.mxu0
  %v427 = vadd.f32 %v121, %v426
  %v428 = vpop.f32.mrf.mxu0
  %v429 = vpop.f32.mrf.mxu0
  %v430 = vadd.f32 %v121, %v429
  %v431 = vpop.f32.mrf.mxu0
  %432 = vmatprep.mubr.bf16.mxu0 0
  %433 = vmatmul.mubr.bf16.gmra.mxu0 %v300
  %v434 = vpop.f32.mrf.mxu0
  %v435 = vadd.f32 %v121, %v434
  %v436 = vpop.f32.mrf.mxu0
  %v437 = vpop.f32.mrf.mxu0
  %v438 = vadd.f32 %v121, %v437
  %v439 = vpop.f32.mrf.mxu0
  %440 = vmatprep.mubr.bf16.mxu0 0
  %441 = vmatmul.mubr.bf16.gmra.mxu0 %v303
  %v442 = vpop.f32.mrf.mxu0
  %v443 = vadd.f32 %v121, %v442
  %v444 = vpop.f32.mrf.mxu0
  %v445 = vpop.f32.mrf.mxu0
  %v446 = vadd.f32 %v121, %v445
  %v447 = vpop.f32.mrf.mxu0
  %448 = vmatprep.mubr.bf16.mxu0 0
  %449 = vmatmul.mubr.bf16.gmra.mxu0 %v306
  %v450 = vpop.f32.mrf.mxu0
  %v451 = vadd.f32 %v121, %v450
  %v452 = vpop.f32.mrf.mxu0
  %v453 = vpop.f32.mrf.mxu0
  %v454 = vadd.f32 %v121, %v453
  %v455 = vpop.f32.mrf.mxu0
  %456 = vmatprep.mubr.bf16.mxu0 0
  %457 = vmatmul.mubr.bf16.gmra.mxu0 %v309
  %v458 = vpop.f32.mrf.mxu0
  %v459 = vadd.f32 %v121, %v458
  %v460 = vpop.f32.mrf.mxu0
  %v461 = vpop.f32.mrf.mxu0
  %v462 = vadd.f32 %v121, %v461
  %v463 = vpop.f32.mrf.mxu0
  %464 = vmatprep.mubr.bf16.mxu0 0
  %465 = vmatmul.mubr.bf16.gmra.mxu0 %v312
  %v466 = vpop.f32.mrf.mxu0
  %v467 = vadd.f32 %v121, %v466
  %v468 = vpop.f32.mrf.mxu0
  %v469 = vpop.f32.mrf.mxu0
  %v470 = vadd.f32 %v121, %v469
  %v471 = vpop.f32.mrf.mxu0
  %472 = vmatprep.mubr.bf16.mxu0 0
  %473 = vmatmul.mubr.bf16.gmra.mxu0 %v315
  %v474 = vpop.f32.mrf.mxu0
  %v475 = vadd.f32 %v121, %v474
  %v476 = vpop.f32.mrf.mxu0
  %v477 = vpop.f32.mrf.mxu0
  %v478 = vadd.f32 %v121, %v477
  %v479 = vpop.f32.mrf.mxu0
  %480 = vmatprep.mubr.bf16.mxu0 0
  %481 = vmatmul.mubr.bf16.gmra.mxu0 %v318
  %v482 = vpop.f32.mrf.mxu0
  %v483 = vadd.f32 %v121, %v482
  %v484 = vpop.f32.mrf.mxu0
  %v485 = vpop.f32.mrf.mxu0
  %v486 = vadd.f32 %v121, %v485
  %v487 = vpop.f32.mrf.mxu0
  %488 = vmatprep.mubr.bf16.mxu0 0
  %489 = vmatmul.mubr.bf16.gmra.mxu0 %v321
  %v490 = vpop.f32.mrf.mxu0
  %v491 = vadd.f32 %v121, %v490
  %v492 = vpop.f32.mrf.mxu0
  %v493 = vpop.f32.mrf.mxu0
  %v494 = vadd.f32 %v121, %v493
  %v495 = vpop.f32.mrf.mxu0
  %496 = vmatprep.mubr.bf16.mxu0 0
  %497 = vmatmul.mubr.bf16.gmra.mxu0 %v324
  %v498 = vpop.f32.mrf.mxu0
  %v499 = vadd.f32 %v121, %v498
  %v500 = vpop.f32.mrf.mxu0
  %v501 = vpop.f32.mrf.mxu0
  %v502 = vadd.f32 %v121, %v501
  %v503 = vpop.f32.mrf.mxu0
  %504 = vmatprep.mubr.bf16.mxu0 0
  %505 = vmatmul.mubr.bf16.gmra.mxu0 %v327
  %v506 = vpop.f32.mrf.mxu0
  %v507 = vadd.f32 %v121, %v506
  %v508 = vpop.f32.mrf.mxu0
  %v509 = vpop.f32.mrf.mxu0
  %v510 = vadd.f32 %v121, %v509
  %v511 = vpop.f32.mrf.mxu0
  %512 = vmatprep.mubr.bf16.mxu0 0
  %513 = vmatmul.mubr.bf16.gmra.mxu0 %v330
  %v514 = vpop.f32.mrf.mxu0
  %v515 = vadd.f32 %v121, %v514
  %v516 = vpop.f32.mrf.mxu0
  %v517 = vpop.f32.mrf.mxu0
  %v518 = vadd.f32 %v121, %v517
  %v519 = vpop.f32.mrf.mxu0
  %520 = vmatprep.mubr.bf16.mxu0 0
  %521 = vmatmul.mubr.bf16.gmra.mxu0 %v333
  %v522 = vpop.f32.mrf.mxu0
  %v523 = vadd.f32 %v121, %v522
  %v524 = vpop.f32.mrf.mxu0
  %v525 = vpop.f32.mrf.mxu0
  %v526 = vadd.f32 %v121, %v525
  %v527 = vpop.f32.mrf.mxu0
  %528 = vmatprep.mubr.bf16.mxu0 0
  %529 = vmatmul.mubr.bf16.gmra.mxu0 %v336
  %v530 = vpop.f32.mrf.mxu0
  %v531 = vadd.f32 %v121, %v530
  %v532 = vpop.f32.mrf.mxu0
  %v533 = vpop.f32.mrf.mxu0
  %v534 = vadd.f32 %v121, %v533
  %v535 = vpop.f32.mrf.mxu0
  %536 = vmatprep.mubr.bf16.mxu0 0
  %537 = vmatmul.mubr.bf16.gmra.mxu0 %v339
  %v538 = vpop.f32.mrf.mxu0
  %v539 = vadd.f32 %v121, %v538
  %v540 = vpop.f32.mrf.mxu0
  %v541 = vpop.f32.mrf.mxu0
  %v542 = vadd.f32 %v121, %v541
  %v543 = vpop.f32.mrf.mxu0
  %544 = vmatprep.mubr.bf16.mxu0 0
  %545 = vmatmul.mubr.bf16.gmra.mxu0 %v342
  %v546 = vpop.f32.mrf.mxu0
  %v547 = vadd.f32 %v121, %v546
  %v548 = vpop.f32.mrf.mxu0
  %v549 = vpop.f32.mrf.mxu0
  %v550 = vadd.f32 %v121, %v549
  %v551 = vpop.f32.mrf.mxu0
  %552 = vmatprep.mubr.bf16.mxu0 0
  %553 = vmatmul.mubr.bf16.gmra.mxu0 %v345
  %v554 = vpop.f32.mrf.mxu0
  %v555 = vadd.f32 %v121, %v554
  %v556 = vpop.f32.mrf.mxu0
  %v557 = vpop.f32.mrf.mxu0
  %v558 = vadd.f32 %v121, %v557
  %v559 = vpop.f32.mrf.mxu0
  %560 = vmatprep.mubr.bf16.mxu0 0
  %561 = vmatmul.mubr.bf16.gmra.mxu0 %v348
  %v562 = vpop.f32.mrf.mxu0
  %v563 = vadd.f32 %v121, %v562
  %v564 = vpop.f32.mrf.mxu0
  %v565 = vpop.f32.mrf.mxu0
  %v566 = vadd.f32 %v121, %v565
  %v567 = vpop.f32.mrf.mxu0
  %568 = vmatprep.mubr.bf16.mxu0 0
  %569 = vmatmul.mubr.bf16.gmra.mxu0 %v351
  %v570 = vpop.f32.mrf.mxu0
  %v571 = vadd.f32 %v121, %v570
  %v572 = vpop.f32.mrf.mxu0
  %v573 = vpop.f32.mrf.mxu0
  %v574 = vadd.f32 %v121, %v573
  %v575 = vpop.f32.mrf.mxu0
  %576 = vmatprep.mubr.bf16.mxu0 0
  %577 = vmatmul.mubr.bf16.gmra.mxu0 %v354
  %v578 = vpop.f32.mrf.mxu0
  %v579 = vadd.f32 %v121, %v578
  %v580 = vpop.f32.mrf.mxu0
  %v581 = vpop.f32.mrf.mxu0
  %v582 = vadd.f32 %v121, %v581
  %v583 = vpop.f32.mrf.mxu0
  %584 = vmatprep.mubr.bf16.mxu0 0
  %585 = vmatmul.mubr.bf16.gmra.mxu0 %v357
  %v586 = vpop.f32.mrf.mxu0
  %v587 = vadd.f32 %v121, %v586
  %v588 = vpop.f32.mrf.mxu0
  %v589 = vpop.f32.mrf.mxu0
  %v590 = vadd.f32 %v121, %v589
  %v591 = vpop.f32.mrf.mxu0
  %592 = vmatprep.mubr.bf16.mxu0 0
  %593 = vmatmul.mubr.bf16.gmra.mxu0 %v360
  %v594 = vpop.f32.mrf.mxu0
  %v595 = vadd.f32 %v121, %v594
  %v596 = vpop.f32.mrf.mxu0
  %v597 = vpop.f32.mrf.mxu0
  %v598 = vadd.f32 %v121, %v597
  %v599 = vpop.f32.mrf.mxu0
  %600 = vmatprep.mubr.bf16.mxu0 0
  %601 = vmatmul.mubr.bf16.gmra.mxu0 %v363
  %v602 = vpop.f32.mrf.mxu0
  %v603 = vadd.f32 %v121, %v602
  %v604 = vpop.f32.mrf.mxu0
  %v605 = vpop.f32.mrf.mxu0
  %v606 = vadd.f32 %v121, %v605
  %v607 = vpop.f32.mrf.mxu0
  %608 = vmatprep.mubr.bf16.mxu0 0
  %609 = vmatmul.mubr.bf16.gmra.mxu0 %v366
  %v610 = vpop.f32.mrf.mxu0
  %v611 = vadd.f32 %v121, %v610
  %v612 = vpop.f32.mrf.mxu0
  %v613 = vpop.f32.mrf.mxu0
  %v614 = vadd.f32 %v121, %v613
  %v615 = vpop.f32.mrf.mxu0
  %616 = vmatprep.mubr.bf16.mxu0 0
  %617 = vmatmul.mubr.bf16.gmra.mxu0 %v369
  %v618 = vpop.f32.mrf.mxu0
  %v619 = vadd.f32 %v121, %v618
  %v620 = vpop.f32.mrf.mxu0
  %v621 = vpop.f32.mrf.mxu0
  %v622 = vadd.f32 %v121, %v621
  %v623 = vpop.f32.mrf.mxu0
  %624 = vmatprep.mubr.bf16.mxu0 0
  %625 = vmatmul.mubr.bf16.gmra.mxu0 %v372
  %v626 = vpop.f32.mrf.mxu0
  %v627 = vadd.f32 %v121, %v626
  %v628 = vpop.f32.mrf.mxu0
  %v629 = vpop.f32.mrf.mxu0
  %v630 = vadd.f32 %v121, %v629
  %v631 = vpop.f32.mrf.mxu0
  %632 = vmatprep.mubr.bf16.mxu0 0
  %633 = vmatmul.mubr.bf16.gmra.mxu0 %v375
  %v634 = vpop.f32.mrf.mxu0
  %v635 = vadd.f32 %v121, %v634
  %v636 = vpop.f32.mrf.mxu0
  %v637 = vpop.f32.mrf.mxu0
  %v638 = vadd.f32 %v121, %v637
  %v639 = vpop.f32.mrf.mxu0
  %640 = vmatprep.mubr.bf16.mxu0 0
  %641 = vmatmul.mubr.bf16.gmra.mxu0 %v378
  %v642 = vpop.f32.mrf.mxu0
  %v643 = vadd.f32 %v121, %v642
  %v644 = vpop.f32.mrf.mxu0
  %v645 = vpop.f32.mrf.mxu0
  %v646 = vadd.f32 %v121, %v645
  %v647 = vpop.f32.mrf.mxu0
  %648 = vmatprep.mubr.bf16.mxu0 0
  %649 = vmatmul.mubr.bf16.gmra.mxu0 %v381
  %v650 = vpop.f32.mrf.mxu0
  %v651 = vadd.f32 %v121, %v650
  %v652 = vpop.f32.mrf.mxu0
  %v653 = vpop.f32.mrf.mxu0
  %v654 = vadd.f32 %v121, %v653
  %v655 = vpop.f32.mrf.mxu0
  %656 = vmatprep.mubr.bf16.mxu0 0
  %657 = vmatmul.mubr.bf16.gmra.mxu0 %v384
  %v658 = vpop.f32.mrf.mxu0
  %v659 = vadd.f32 %v121, %v658
  %v660 = vpop.f32.mrf.mxu0
  %v661 = vpop.f32.mrf.mxu0
  %v662 = vadd.f32 %v121, %v661
  %v663 = vpop.f32.mrf.mxu0
  %664 = vmatprep.mubr.bf16.mxu0 0
  %665 = vmatmul.mubr.bf16.gmra.mxu0 %v387
  %v666 = vpop.f32.mrf.mxu0
  %v667 = vadd.f32 %v121, %v666
  %v668 = vpop.f32.mrf.mxu0
  %v669 = vpop.f32.mrf.mxu0
  %v670 = vadd.f32 %v121, %v669
  %v671 = vpop.f32.mrf.mxu0
  %672 = vmatprep.mubr.bf16.mxu0 0
  %673 = vmatmul.mubr.bf16.gmra.mxu0 %v390
  %v674 = vpop.f32.mrf.mxu0
  %v675 = vadd.f32 %v121, %v674
  %v676 = vpop.f32.mrf.mxu0
  %v677 = vpop.f32.mrf.mxu0
  %v678 = vadd.f32 %v121, %v677
  %v679 = vpop.f32.mrf.mxu0
  %680 = vdwg.mxu0
  %v681 = vmax.f32 %v427, 0.0
  %v682 = vmax.f32 %v430, 0.0
  %v683 = vmax.f32 %v435, 0.0
  %v684 = vmax.f32 %v438, 0.0
  %v685 = vmax.f32 %v443, 0.0
  %v686 = vmax.f32 %v446, 0.0
  %v687 = vmax.f32 %v451, 0.0
  %v688 = vmax.f32 %v454, 0.0
  %v689 = vmax.f32 %v459, 0.0
  %v690 = vmax.f32 %v462, 0.0
  %v691 = vmax.f32 %v467, 0.0
  %v692 = vmax.f32 %v470, 0.0
  %v693 = vmax.f32 %v475, 0.0
  %v694 = vmax.f32 %v478, 0.0
  %v695 = vmax.f32 %v483, 0.0
  %v696 = vmax.f32 %v486, 0.0
  %v697 = vmax.f32 %v491, 0.0
  %v698 = vmax.f32 %v494, 0.0
  %v699 = vmax.f32 %v499, 0.0
  %v700 = vmax.f32 %v502, 0.0
  %v701 = vmax.f32 %v507, 0.0
  %v702 = vmax.f32 %v510, 0.0
  %v703 = vmax.f32 %v515, 0.0
  %v704 = vmax.f32 %v518, 0.0
  %v705 = vmax.f32 %v523, 0.0
  %v706 = vmax.f32 %v526, 0.0
  %v707 = vmax.f32 %v531, 0.0
  %v708 = vmax.f32 %v534, 0.0
  %v709 = vmax.f32 %v539, 0.0
  %v710 = vmax.f32 %v542, 0.0
  %v711 = vmax.f32 %v547, 0.0
  %v712 = vmax.f32 %v550, 0.0
  %v713 = vmax.f32 %v555, 0.0
  %v714 = vmax.f32 %v558, 0.0
  %v715 = vmax.f32 %v563, 0.0
  %v716 = vmax.f32 %v566, 0.0
  %v717 = vmax.f32 %v571, 0.0
  %v718 = vmax.f32 %v574, 0.0
  %v719 = vmax.f32 %v579, 0.0
  %v720 = vmax.f32 %v582, 0.0
  %v721 = vmax.f32 %v587, 0.0
  %v722 = vmax.f32 %v590, 0.0
  %v723 = vmax.f32 %v595, 0.0
  %v724 = vmax.f32 %v598, 0.0
  %v725 = vmax.f32 %v603, 0.0
  %v726 = vmax.f32 %v606, 0.0
  %v727 = vmax.f32 %v611, 0.0
  %v728 = vmax.f32 %v614, 0.0
  %v729 = vmax.f32 %v619, 0.0
  %v730 = vmax.f32 %v622, 0.0
  %v731 = vmax.f32 %v627, 0.0
  %v732 = vmax.f32 %v630, 0.0
  %v733 = vmax.f32 %v635, 0.0
  %v734 = vmax.f32 %v638, 0.0
  %v735 = vmax.f32 %v643, 0.0
  %v736 = vmax.f32 %v646, 0.0
  %v737 = vmax.f32 %v651, 0.0
  %v738 = vmax.f32 %v654, 0.0
  %v739 = vmax.f32 %v659, 0.0
  %v740 = vmax.f32 %v662, 0.0
  %v741 = vmax.f32 %v667, 0.0
  %v742 = vmax.f32 %v670, 0.0
  %v743 = vmax.f32 %v675, 0.0
  %v744 = vmax.f32 %v678, 0.0
  %v745 = vadd.f32 %v681, %v682
  %v746 = vadd.f32 %v745, %v683
  %v747 = vadd.f32 %v746, %v684
  %v748 = vadd.f32 %v747, %v685
  %v749 = vadd.f32 %v748, %v686
  %v750 = vadd.f32 %v749, %v687
  %v751 = vadd.f32 %v750, %v688
  %v752 = vadd.f32 %v751, %v689
  %v753 = vadd.f32 %v752, %v690
  %v754 = vadd.f32 %v753, %v691
  %v755 = vadd.f32 %v754, %v692
  %v756 = vadd.f32 %v755, %v693
  %v757 = vadd.f32 %v756, %v694
  %v758 = vadd.f32 %v757, %v695
  %v759 = vadd.f32 %v758, %v696
  %v760 = vadd.f32 %v759, %v697
  %v761 = vadd.f32 %v760, %v698
  %v762 = vadd.f32 %v761, %v699
  %v763 = vadd.f32 %v762, %v700
  %v764 = vadd.f32 %v763, %v701
  %v765 = vadd.f32 %v764, %v702
  %v766 = vadd.f32 %v765, %v703
  %v767 = vadd.f32 %v766, %v704
  %v768 = vadd.f32 %v767, %v705
  %v769 = vadd.f32 %v768, %v706
  %v770 = vadd.f32 %v769, %v707
  %v771 = vadd.f32 %v770, %v708
  %v772 = vadd.f32 %v771, %v709
  %v773 = vadd.f32 %v772, %v710
  %v774 = vadd.f32 %v773, %v711
  %v775 = vadd.f32 %v774, %v712
  %v776 = vrot.slane %v775, 4
  %v777 = vadd.f32 %v775, %v776
  %v778 = vrot.slane %v777, 2
  %v779 = vadd.f32 %v777, %v778
  %v780 = vrot.slane %v779, 1
  %v781 = vadd.f32 %v779, %v780
  %v782 = vadd.f32 %v713, %v714
  %v783 = vadd.f32 %v782, %v715
  %v784 = vadd.f32 %v783, %v716
  %v785 = vadd.f32 %v784, %v717
  %v786 = vadd.f32 %v785, %v718
  %v787 = vadd.f32 %v786, %v719
  %v788 = vadd.f32 %v787, %v720
  %v789 = vadd.f32 %v788, %v721
  %v790 = vadd.f32 %v789, %v722
  %v791 = vadd.f32 %v790, %v723
  %v792 = vadd.f32 %v791, %v724
  %v793 = vadd.f32 %v792, %v725
  %v794 = vadd.f32 %v793, %v726
  %v795 = vadd.f32 %v794, %v727
  %v796 = vadd.f32 %v795, %v728
  %v797 = vadd.f32 %v796, %v729
  %v798 = vadd.f32 %v797, %v730
  %v799 = vadd.f32 %v798, %v731
  %v800 = vadd.f32 %v799, %v732
  %v801 = vadd.f32 %v800, %v733
  %v802 = vadd.f32 %v801, %v734
  %v803 = vadd.f32 %v802, %v735
  %v804 = vadd.f32 %v803, %v736
  %v805 = vadd.f32 %v804, %v737
  %v806 = vadd.f32 %v805, %v738
  %v807 = vadd.f32 %v806, %v739
  %v808 = vadd.f32 %v807, %v740
  %v809 = vadd.f32 %v808, %v741
  %v810 = vadd.f32 %v809, %v742
  %v811 = vadd.f32 %v810, %v743
  %v812 = vadd.f32 %v811, %v744
  %v813 = vrot.slane %v812, 4
  %v814 = vadd.f32 %v812, %v813
  %v815 = vrot.slane %v814, 2
  %v816 = vadd.f32 %v814, %v815
  %v817 = vrot.slane %v816, 1
  %v818 = vadd.f32 %v816, %v817
  %v819 = vmul.f32 %v781, 0.00390625
  %v820 = vmul.f32 %v818, 0.00390625
  %v821 = vpack.c.bf16 %v819, %v819
  %v822 = vpack.c.bf16 %v820, %v820
  %v823 = vld [vmem:[%s3] sm:$0xf]
  %v824 = vld [vmem:[%s3 + $0x4] sm:$0xf]
  %v825 = vld [vmem:[%s3 + $0x8] sm:$0xf]
  %v826 = vld [vmem:[%s3 + $0xc] sm:$0xf]
  %v827 = vld [vmem:[%s3 + $0x10] sm:$0xf]
  %v828 = vld [vmem:[%s3 + $0x14] sm:$0xf]
  %v829 = vld [vmem:[%s3 + $0x18] sm:$0xf]
  %v830 = vld [vmem:[%s3 + $0x1c] sm:$0xf]
  %v831 = vld [vmem:[%s3 + $0x20] sm:$0xf]
  %v832 = vld [vmem:[%s3 + $0x24] sm:$0xf]
  %v833 = vld [vmem:[%s3 + $0x28] sm:$0xf]
  %v834 = vld [vmem:[%s3 + $0x2c] sm:$0xf]
  %v835 = vld [vmem:[%s3 + $0x30] sm:$0xf]
  %v836 = vld [vmem:[%s3 + $0x34] sm:$0xf]
  %v837 = vld [vmem:[%s3 + $0x38] sm:$0xf]
  %v838 = vld [vmem:[%s3 + $0x3c] sm:$0xf]
  %v839 = vld [vmem:[%s4] sm:$0x1]
  %v841 = vlaneseq
  %v842 = vshrl.u32 %v841, 7
  %v843 = vsub.s32 0, %v842
  %v844 = vrot.slane %v839, %v843
  %v848 = vunpack.c.l.b16 %v821
  %v849 = vunpack.c.l.b16 %v822
  %vm850 = vcmask 1041409
  %v851 = vsel %vm850, %v849, %v848
  %v852 = vpack.c.b16 %v851, %v851
  %v870 = vunpack.c.l.b16 %v823
  %v871 = vunpack.c.l.b16 %v824
  %v872 = vunpack.c.l.b16 %v825
  %v873 = vunpack.c.l.b16 %v826
  %v874 = vunpack.c.l.b16 %v827
  %v875 = vunpack.c.l.b16 %v828
  %v876 = vunpack.c.l.b16 %v829
  %v877 = vunpack.c.l.b16 %v830
  %v878 = vunpack.c.l.b16 %v831
  %v879 = vunpack.c.l.b16 %v832
  %v880 = vunpack.c.l.b16 %v833
  %v881 = vunpack.c.l.b16 %v834
  %v882 = vunpack.c.l.b16 %v835
  %v883 = vunpack.c.l.b16 %v836
  %v884 = vunpack.c.l.b16 %v837
  %v885 = vunpack.c.l.b16 %v838
  %v886 = vpack.c.b16 %v871, %v870
  %v887 = vpack.c.b16 %v873, %v872
  %v888 = vpack.c.b16 %v875, %v874
  %v889 = vpack.c.b16 %v877, %v876
  %v890 = vpack.c.b16 %v879, %v878
  %v891 = vpack.c.b16 %v881, %v880
  %v892 = vpack.c.b16 %v883, %v882
  %v893 = vpack.c.b16 %v885, %v884
  %902 = vmatprep.subr.bf16.mxu0 0
  %903 = vmatpush1.bf16.msra.mxu0 %v893
  %904 = vmatprep.subr.bf16.mxu0 0
  %905 = vmatpush1.bf16.msra.mxu0 %v892
  %906 = vmatprep.subr.bf16.mxu0 0
  %907 = vmatpush1.bf16.msra.mxu0 %v891
  %908 = vmatprep.subr.bf16.mxu0 0
  %909 = vmatpush1.bf16.msra.mxu0 %v890
  %910 = vmatprep.subr.bf16.mxu0 0
  %911 = vmatpush1.bf16.msra.mxu0 %v889
  %912 = vmatprep.subr.bf16.mxu0 0
  %913 = vmatpush1.bf16.msra.mxu0 %v888
  %914 = vmatprep.subr.bf16.mxu0 0
  %915 = vmatpush1.bf16.msra.mxu0 %v887
  %916 = vmatprep.subr.bf16.mxu0 0
  %917 = vmatpush1.bf16.msra.mxu0 %v886
  %918 = vmatprep.subr.bf16.mxu0 0
  %919 = vmatpush2.bf16.msra.mxu0 0
  %920 = vmatprep.subr.bf16.mxu0 0
  %921 = vmatpush2.bf16.msra.mxu0 0
  %922 = vmatprep.subr.bf16.mxu0 0
  %923 = vmatpush2.bf16.msra.mxu0 0
  %924 = vmatprep.subr.bf16.mxu0 0
  %925 = vmatpush2.bf16.msra.mxu0 0
  %926 = vmatprep.subr.bf16.mxu0 0
  %927 = vmatpush2.bf16.msra.mxu0 0
  %928 = vmatprep.subr.bf16.mxu0 0
  %929 = vmatpush2.bf16.msra.mxu0 0
  %930 = vmatprep.subr.bf16.mxu0 0
  %931 = vmatpush2.bf16.msra.mxu0 0
  %932 = vmatprep.subr.bf16.mxu0 0
  %933 = vmatpush2.bf16.msra.mxu0 0
  %934 = vmatprep.mubr.bf16.mxu0 0
  %935 = vmatmul.mubr.bf16.gmra.mxu0 %v852
  %v936 = vpop.f32.mrf.mxu0
  %v937 = vadd.f32 %v844, %v936
  %v938 = vpop.f32.mrf.mxu0
  %v939 = vpop.f32.mrf.mxu0
  %v940 = vpop.f32.mrf.mxu0
  %941 = vdwg.mxu0
  %v942 = vld [vmem:[%s5] sm:$0xff]
  %v943 = vld [vmem:[%s5 + $0x8] sm:$0xff]
  %v944 = vpack.c.bf16 %v943, %v942
  %v945 = vld [vmem:[%s6] sm:$0xff]
  %v946 = vld [vmem:[%s6 + $0x8] sm:$0xff]
  %v947 = vld [vmem:[%s6 + $0x10] sm:$0xff]
  %v948 = vld [vmem:[%s6 + $0x18] sm:$0xff]
  %v949 = vld [vmem:[%s6 + $0x20] sm:$0xff]
  %v950 = vld [vmem:[%s6 + $0x28] sm:$0xff]
  %v951 = vld [vmem:[%s6 + $0x30] sm:$0xff]
  %v952 = vld [vmem:[%s6 + $0x38] sm:$0xff]
  %v953 = vld [vmem:[%s8] sm:$0xf]
  %v955 = vlaneseq
  %v956 = vshrl.u32 %v955, 7
  %v957 = vsub.s32 0, %v956
  %v958 = vrot.slane %v953, %v957
  %v959 = vlaneseq
  %v960 = vshrl.u32 %v959, 7
  %v961 = vsub.s32 1, %v960
  %v962 = vrot.slane %v953, %v961
  %v963 = vlaneseq
  %v964 = vshrl.u32 %v963, 7
  %v965 = vsub.s32 2, %v964
  %v966 = vrot.slane %v953, %v965
  %v967 = vlaneseq
  %v968 = vshrl.u32 %v967, 7
  %v969 = vsub.s32 3, %v968
  %v970 = vrot.slane %v953, %v969
  %v983 = vunpack.c.l.b16 %v945
  %v984 = vunpack.c.h.b16 %v945
  %v985 = vunpack.c.l.b16 %v946
  %v986 = vunpack.c.h.b16 %v946
  %v987 = vunpack.c.l.b16 %v947
  %v988 = vunpack.c.h.b16 %v947
  %v989 = vunpack.c.l.b16 %v948
  %v990 = vunpack.c.h.b16 %v948
  %v991 = vunpack.c.l.b16 %v949
  %v992 = vunpack.c.h.b16 %v949
  %v993 = vunpack.c.l.b16 %v950
  %v994 = vunpack.c.h.b16 %v950
  %v995 = vunpack.c.l.b16 %v951
  %v996 = vunpack.c.h.b16 %v951
  %v997 = vunpack.c.l.b16 %v952
  %v998 = vunpack.c.h.b16 %v952
  %v999 = vpack.c.b16 %v987, %v983
  %v1000 = vpack.c.b16 %v988, %v984
  %v1001 = vpack.c.b16 %v989, %v985
  %v1002 = vpack.c.b16 %v990, %v986
  %v1003 = vpack.c.b16 %v995, %v991
  %v1004 = vpack.c.b16 %v996, %v992
  %v1005 = vpack.c.b16 %v997, %v993
  %v1006 = vpack.c.b16 %v998, %v994
  %v1016 = vsel %vm295, %v944, 0
  %1018 = vmatprep.subr.bf16.mxu0 0
  %1019 = vmatpush1.bf16.msra.mxu0 0
  %1020 = vmatprep.subr.bf16.mxu0 0
  %1021 = vmatpush1.bf16.msra.mxu0 0
  %1022 = vmatprep.subr.bf16.mxu0 0
  %1023 = vmatpush1.bf16.msra.mxu0 0
  %1024 = vmatprep.subr.bf16.mxu0 0
  %1025 = vmatpush1.bf16.msra.mxu0 0
  %1026 = vmatprep.subr.bf16.mxu0 0
  %1027 = vmatpush1.bf16.msra.mxu0 0
  %1028 = vmatprep.subr.bf16.mxu0 0
  %1029 = vmatpush1.bf16.msra.mxu0 0
  %1030 = vmatprep.subr.bf16.mxu0 %v1004
  %1031 = vmatpush1.bf16.msra.mxu0 %v1003
  %1032 = vmatprep.subr.bf16.mxu0 %v1000
  %1033 = vmatpush1.bf16.msra.mxu0 %v999
  %1034 = vmatprep.subr.bf16.mxu0 0
  %1035 = vmatpush2.bf16.msra.mxu0 0
  %1036 = vmatprep.subr.bf16.mxu0 0
  %1037 = vmatpush2.bf16.msra.mxu0 0
  %1038 = vmatprep.subr.bf16.mxu0 0
  %1039 = vmatpush2.bf16.msra.mxu0 0
  %1040 = vmatprep.subr.bf16.mxu0 0
  %1041 = vmatpush2.bf16.msra.mxu0 0
  %1042 = vmatprep.subr.bf16.mxu0 0
  %1043 = vmatpush2.bf16.msra.mxu0 0
  %1044 = vmatprep.subr.bf16.mxu0 0
  %1045 = vmatpush2.bf16.msra.mxu0 0
  %1046 = vmatprep.subr.bf16.mxu0 0
  %1047 = vmatpush2.bf16.msra.mxu0 0
  %1048 = vmatprep.subr.bf16.mxu0 0
  %1049 = vmatpush2.bf16.msra.mxu0 0
  %1050 = vmatprep.mubr.bf16.mxu0 0
  %1051 = vmatmul.mubr.bf16.gmra.mxu0 %v1016
  %v1052 = vpop.f32.mrf.mxu0
  %v1053 = vadd.f32 %v958, %v1052
  %v1054 = vpop.f32.mrf.mxu0
  %v1055 = vpop.f32.mrf.mxu0
  %v1056 = vadd.f32 %v958, %v1055
  %v1057 = vpop.f32.mrf.mxu0
  %v1058 = vadd.f32 %v962, %v1057
  %1059 = vdwg.mxu0
  %1060 = vmatprep.subr.bf16.mxu0 0
  %1061 = vmatpush1.bf16.msra.mxu0 0
  %1062 = vmatprep.subr.bf16.mxu0 0
  %1063 = vmatpush1.bf16.msra.mxu0 0
  %1064 = vmatprep.subr.bf16.mxu0 0
  %1065 = vmatpush1.bf16.msra.mxu0 0
  %1066 = vmatprep.subr.bf16.mxu0 0
  %1067 = vmatpush1.bf16.msra.mxu0 0
  %1068 = vmatprep.subr.bf16.mxu0 0
  %1069 = vmatpush1.bf16.msra.mxu0 0
  %1070 = vmatprep.subr.bf16.mxu0 0
  %1071 = vmatpush1.bf16.msra.mxu0 0
  %1072 = vmatprep.subr.bf16.mxu0 %v1006
  %1073 = vmatpush1.bf16.msra.mxu0 %v1005
  %1074 = vmatprep.subr.bf16.mxu0 %v1002
  %1075 = vmatpush1.bf16.msra.mxu0 %v1001
  %1076 = vmatprep.subr.bf16.mxu0 0
  %1077 = vmatpush2.bf16.msra.mxu0 0
  %1078 = vmatprep.subr.bf16.mxu0 0
  %1079 = vmatpush2.bf16.msra.mxu0 0
  %1080 = vmatprep.subr.bf16.mxu0 0
  %1081 = vmatpush2.bf16.msra.mxu0 0
  %1082 = vmatprep.subr.bf16.mxu0 0
  %1083 = vmatpush2.bf16.msra.mxu0 0
  %1084 = vmatprep.subr.bf16.mxu0 0
  %1085 = vmatpush2.bf16.msra.mxu0 0
  %1086 = vmatprep.subr.bf16.mxu0 0
  %1087 = vmatpush2.bf16.msra.mxu0 0
  %1088 = vmatprep.subr.bf16.mxu0 0
  %1089 = vmatpush2.bf16.msra.mxu0 0
  %1090 = vmatprep.subr.bf16.mxu0 0
  %1091 = vmatpush2.bf16.msra.mxu0 0
  %1092 = vmatprep.mubr.bf16.mxu0 0
  %1093 = vmatmul.mubr.bf16.gmra.mxu0 %v1016
  %v1094 = vpop.f32.mrf.mxu0
  %v1095 = vadd.f32 %v966, %v1094
  %v1096 = vpop.f32.mrf.mxu0
  %v1097 = vadd.f32 %v970, %v1096
  %v1098 = vpop.f32.mrf.mxu0
  %v1099 = vadd.f32 %v966, %v1098
  %v1100 = vpop.f32.mrf.mxu0
  %v1101 = vadd.f32 %v970, %v1100
  %1102 = vdwg.mxu0
  %v1103 = vld [vmem:[%s7] sm:$0xff]
  %v1104 = vld [vmem:[%s7 + $0x8] sm:$0xff]
  %v1105 = vld [vmem:[%s7 + $0x10] sm:$0xff]
  %v1106 = vld [vmem:[%s7 + $0x18] sm:$0xff]
  %v1107 = vld [vmem:[%s7 + $0x20] sm:$0xff]
  %v1108 = vld [vmem:[%s7 + $0x28] sm:$0xff]
  %v1109 = vld [vmem:[%s7 + $0x30] sm:$0xff]
  %v1110 = vld [vmem:[%s7 + $0x38] sm:$0xff]
  %v1111 = vld [vmem:[%s7 + $0x40] sm:$0xff]
  %v1112 = vld [vmem:[%s7 + $0x48] sm:$0xff]
  %v1113 = vld [vmem:[%s7 + $0x50] sm:$0xff]
  %v1114 = vld [vmem:[%s7 + $0x58] sm:$0xff]
  %v1115 = vld [vmem:[%s7 + $0x60] sm:$0xff]
  %v1116 = vld [vmem:[%s7 + $0x68] sm:$0xff]
  %v1117 = vld [vmem:[%s7 + $0x70] sm:$0xff]
  %v1118 = vld [vmem:[%s7 + $0x78] sm:$0xff]
  %v1119 = vld [vmem:[%s7 + $0x80] sm:$0xff]
  %v1120 = vld [vmem:[%s7 + $0x88] sm:$0xff]
  %v1121 = vld [vmem:[%s7 + $0x90] sm:$0xff]
  %v1122 = vld [vmem:[%s7 + $0x98] sm:$0xff]
  %v1123 = vld [vmem:[%s7 + $0xa0] sm:$0xff]
  %v1124 = vld [vmem:[%s7 + $0xa8] sm:$0xff]
  %v1125 = vld [vmem:[%s7 + $0xb0] sm:$0xff]
  %v1126 = vld [vmem:[%s7 + $0xb8] sm:$0xff]
  %v1127 = vld [vmem:[%s7 + $0xc0] sm:$0xff]
  %v1128 = vld [vmem:[%s7 + $0xc8] sm:$0xff]
  %v1129 = vld [vmem:[%s7 + $0xd0] sm:$0xff]
  %v1130 = vld [vmem:[%s7 + $0xd8] sm:$0xff]
  %v1131 = vld [vmem:[%s7 + $0xe0] sm:$0xff]
  %v1132 = vld [vmem:[%s7 + $0xe8] sm:$0xff]
  %v1133 = vld [vmem:[%s7 + $0xf0] sm:$0xff]
  %v1134 = vld [vmem:[%s7 + $0xf8] sm:$0xff]
  %v1135 = vxor.u32 %v1053, 2147483648
  %v1136 = vmul.f32 %v1135, 1.442695
  %v1137 = vpow.pop %v1136
  %v1138 = vadd.f32 %v1137, 1.0
  %v1139 = vrcp.pop %v1138
  %v1140 = vmul.f32 1.0, %v1139
  %v1141 = vtanh.pop %v1095
  %v1142 = vxor.u32 %v1097, 2147483648
  %v1143 = vmul.f32 %v1142, 1.442695
  %v1144 = vpow.pop %v1143
  %v1145 = vadd.f32 %v1144, 1.0
  %v1146 = vrcp.pop %v1145
  %v1147 = vmul.f32 1.0, %v1146
  %v1148 = vmul.f32 %v1140, %v1141
  %v1149 = vtanh.pop %v1148
  %v1150 = vmul.f32 %v1147, %v1149
  %v1151 = vpack.c.bf16 %v1150, %v1150
  %v1184 = vunpack.c.l.b16 %v1103
  %v1185 = vunpack.c.h.b16 %v1103
  %v1186 = vunpack.c.l.b16 %v1104
  %v1187 = vunpack.c.h.b16 %v1104
  %v1188 = vunpack.c.l.b16 %v1105
  %v1189 = vunpack.c.h.b16 %v1105
  %v1190 = vunpack.c.l.b16 %v1106
  %v1191 = vunpack.c.h.b16 %v1106
  %v1192 = vunpack.c.l.b16 %v1107
  %v1193 = vunpack.c.h.b16 %v1107
  %v1194 = vunpack.c.l.b16 %v1108
  %v1195 = vunpack.c.h.b16 %v1108
  %v1196 = vunpack.c.l.b16 %v1109
  %v1197 = vunpack.c.h.b16 %v1109
  %v1198 = vunpack.c.l.b16 %v1110
  %v1199 = vunpack.c.h.b16 %v1110
  %v1200 = vunpack.c.l.b16 %v1111
  %v1201 = vunpack.c.h.b16 %v1111
  %v1202 = vunpack.c.l.b16 %v1112
  %v1203 = vunpack.c.h.b16 %v1112
  %v1204 = vunpack.c.l.b16 %v1113
  %v1205 = vunpack.c.h.b16 %v1113
  %v1206 = vunpack.c.l.b16 %v1114
  %v1207 = vunpack.c.h.b16 %v1114
  %v1208 = vunpack.c.l.b16 %v1115
  %v1209 = vunpack.c.h.b16 %v1115
  %v1210 = vunpack.c.l.b16 %v1116
  %v1211 = vunpack.c.h.b16 %v1116
  %v1212 = vunpack.c.l.b16 %v1117
  %v1213 = vunpack.c.h.b16 %v1117
  %v1214 = vunpack.c.l.b16 %v1118
  %v1215 = vunpack.c.h.b16 %v1118
  %v1216 = vunpack.c.l.b16 %v1119
  %v1217 = vunpack.c.h.b16 %v1119
  %v1218 = vunpack.c.l.b16 %v1120
  %v1219 = vunpack.c.h.b16 %v1120
  %v1220 = vunpack.c.l.b16 %v1121
  %v1221 = vunpack.c.h.b16 %v1121
  %v1222 = vunpack.c.l.b16 %v1122
  %v1223 = vunpack.c.h.b16 %v1122
  %v1224 = vunpack.c.l.b16 %v1123
  %v1225 = vunpack.c.h.b16 %v1123
  %v1226 = vunpack.c.l.b16 %v1124
  %v1227 = vunpack.c.h.b16 %v1124
  %v1228 = vunpack.c.l.b16 %v1125
  %v1229 = vunpack.c.h.b16 %v1125
  %v1230 = vunpack.c.l.b16 %v1126
  %v1231 = vunpack.c.h.b16 %v1126
  %v1232 = vunpack.c.l.b16 %v1127
  %v1233 = vunpack.c.h.b16 %v1127
  %v1234 = vunpack.c.l.b16 %v1128
  %v1235 = vunpack.c.h.b16 %v1128
  %v1236 = vunpack.c.l.b16 %v1129
  %v1237 = vunpack.c.h.b16 %v1129
  %v1238 = vunpack.c.l.b16 %v1130
  %v1239 = vunpack.c.h.b16 %v1130
  %v1240 = vunpack.c.l.b16 %v1131
  %v1241 = vunpack.c.h.b16 %v1131
  %v1242 = vunpack.c.l.b16 %v1132
  %v1243 = vunpack.c.h.b16 %v1132
  %v1244 = vunpack.c.l.b16 %v1133
  %v1245 = vunpack.c.h.b16 %v1133
  %v1246 = vunpack.c.l.b16 %v1134
  %v1247 = vunpack.c.h.b16 %v1134
  %v1248 = vpack.c.b16 %v1188, %v1184
  %v1249 = vpack.c.b16 %v1189, %v1185
  %v1250 = vpack.c.b16 %v1190, %v1186
  %v1251 = vpack.c.b16 %v1191, %v1187
  %v1252 = vpack.c.b16 %v1196, %v1192
  %v1253 = vpack.c.b16 %v1197, %v1193
  %v1254 = vpack.c.b16 %v1198, %v1194
  %v1255 = vpack.c.b16 %v1199, %v1195
  %v1256 = vpack.c.b16 %v1204, %v1200
  %v1257 = vpack.c.b16 %v1205, %v1201
  %v1258 = vpack.c.b16 %v1206, %v1202
  %v1259 = vpack.c.b16 %v1207, %v1203
  %v1260 = vpack.c.b16 %v1212, %v1208
  %v1261 = vpack.c.b16 %v1213, %v1209
  %v1262 = vpack.c.b16 %v1214, %v1210
  %v1263 = vpack.c.b16 %v1215, %v1211
  %v1264 = vpack.c.b16 %v1220, %v1216
  %v1265 = vpack.c.b16 %v1221, %v1217
  %v1266 = vpack.c.b16 %v1222, %v1218
  %v1267 = vpack.c.b16 %v1223, %v1219
  %v1268 = vpack.c.b16 %v1228, %v1224
  %v1269 = vpack.c.b16 %v1229, %v1225
  %v1270 = vpack.c.b16 %v1230, %v1226
  %v1271 = vpack.c.b16 %v1231, %v1227
  %v1272 = vpack.c.b16 %v1236, %v1232
  %v1273 = vpack.c.b16 %v1237, %v1233
  %v1274 = vpack.c.b16 %v1238, %v1234
  %v1275 = vpack.c.b16 %v1239, %v1235
  %v1276 = vpack.c.b16 %v1244, %v1240
  %v1277 = vpack.c.b16 %v1245, %v1241
  %v1278 = vpack.c.b16 %v1246, %v1242
  %v1279 = vpack.c.b16 %v1247, %v1243
  %1312 = vmatprep.subr.bf16.mxu0 %v1277
  %1313 = vmatpush1.bf16.msra.mxu0 %v1276
  %1314 = vmatprep.subr.bf16.mxu0 %v1273
  %1315 = vmatpush1.bf16.msra.mxu0 %v1272
  %1316 = vmatprep.subr.bf16.mxu0 %v1269
  %1317 = vmatpush1.bf16.msra.mxu0 %v1268
  %1318 = vmatprep.subr.bf16.mxu0 %v1265
  %1319 = vmatpush1.bf16.msra.mxu0 %v1264
  %1320 = vmatprep.subr.bf16.mxu0 %v1261
  %1321 = vmatpush1.bf16.msra.mxu0 %v1260
  %1322 = vmatprep.subr.bf16.mxu0 %v1257
  %1323 = vmatpush1.bf16.msra.mxu0 %v1256
  %1324 = vmatprep.subr.bf16.mxu0 %v1253
  %1325 = vmatpush1.bf16.msra.mxu0 %v1252
  %1326 = vmatprep.subr.bf16.mxu0 %v1249
  %1327 = vmatpush1.bf16.msra.mxu0 %v1248
  %1328 = vmatprep.subr.bf16.mxu0 0
  %1329 = vmatpush2.bf16.msra.mxu0 0
  %1330 = vmatprep.subr.bf16.mxu0 0
  %1331 = vmatpush2.bf16.msra.mxu0 0
  %1332 = vmatprep.subr.bf16.mxu0 0
  %1333 = vmatpush2.bf16.msra.mxu0 0
  %1334 = vmatprep.subr.bf16.mxu0 0
  %1335 = vmatpush2.bf16.msra.mxu0 0
  %1336 = vmatprep.subr.bf16.mxu0 0
  %1337 = vmatpush2.bf16.msra.mxu0 0
  %1338 = vmatprep.subr.bf16.mxu0 0
  %1339 = vmatpush2.bf16.msra.mxu0 0
  %1340 = vmatprep.subr.bf16.mxu0 0
  %1341 = vmatpush2.bf16.msra.mxu0 0
  %1342 = vmatprep.subr.bf16.mxu0 0
  %1343 = vmatpush2.bf16.msra.mxu0 0
  %1344 = vmatprep.mubr.bf16.mxu0 0
  %1345 = vmatmul.mubr.bf16.gmra.mxu0 %v1151
  %v1346 = vpop.f32.mrf.mxu0
  %v1347 = vadd.f32 0.0, %v1346
  %v1348 = vpop.f32.mrf.mxu0
  %v1349 = vadd.f32 0.0, %v1348
  %v1350 = vpop.f32.mrf.mxu0
  %v1351 = vpop.f32.mrf.mxu0
  %1352 = vdwg.mxu0
  %1353 = vmatprep.subr.bf16.mxu0 %v1279
  %1354 = vmatpush1.bf16.msra.mxu0 %v1278
  %1355 = vmatprep.subr.bf16.mxu0 %v1275
  %1356 = vmatpush1.bf16.msra.mxu0 %v1274
  %1357 = vmatprep.subr.bf16.mxu0 %v1271
  %1358 = vmatpush1.bf16.msra.mxu0 %v1270
  %1359 = vmatprep.subr.bf16.mxu0 %v1267
  %1360 = vmatpush1.bf16.msra.mxu0 %v1266
  %1361 = vmatprep.subr.bf16.mxu0 %v1263
  %1362 = vmatpush1.bf16.msra.mxu0 %v1262
  %1363 = vmatprep.subr.bf16.mxu0 %v1259
  %1364 = vmatpush1.bf16.msra.mxu0 %v1258
  %1365 = vmatprep.subr.bf16.mxu0 %v1255
  %1366 = vmatpush1.bf16.msra.mxu0 %v1254
  %1367 = vmatprep.subr.bf16.mxu0 %v1251
  %1368 = vmatpush1.bf16.msra.mxu0 %v1250
  %1369 = vmatprep.subr.bf16.mxu0 0
  %1370 = vmatpush2.bf16.msra.mxu0 0
  %1371 = vmatprep.subr.bf16.mxu0 0
  %1372 = vmatpush2.bf16.msra.mxu0 0
  %1373 = vmatprep.subr.bf16.mxu0 0
  %1374 = vmatpush2.bf16.msra.mxu0 0
  %1375 = vmatprep.subr.bf16.mxu0 0
  %1376 = vmatpush2.bf16.msra.mxu0 0
  %1377 = vmatprep.subr.bf16.mxu0 0
  %1378 = vmatpush2.bf16.msra.mxu0 0
  %1379 = vmatprep.subr.bf16.mxu0 0
  %1380 = vmatpush2.bf16.msra.mxu0 0
  %1381 = vmatprep.subr.bf16.mxu0 0
  %1382 = vmatpush2.bf16.msra.mxu0 0
  %1383 = vmatprep.subr.bf16.mxu0 0
  %1384 = vmatpush2.bf16.msra.mxu0 0
  %1385 = vmatprep.mubr.bf16.mxu0 0
  %1386 = vmatmul.mubr.bf16.gmra.mxu0 %v1151
  %v1387 = vpop.f32.mrf.mxu0
  %v1388 = vadd.f32 0.0, %v1387
  %v1389 = vpop.f32.mrf.mxu0
  %v1390 = vadd.f32 0.0, %v1389
  %v1391 = vpop.f32.mrf.mxu0
  %v1392 = vpop.f32.mrf.mxu0
  %1393 = vdwg.mxu0
  %v1394 = vadd.f32 %v1056, %v1347
  %v1395 = vadd.f32 %v1058, %v1349
  %v1396 = vadd.f32 %v1099, %v1388
  %v1397 = vadd.f32 %v1101, %v1390
  %v1398 = vxor.u32 %v1394, 2147483648
  %v1399 = vmul.f32 %v1398, 1.442695
  %v1400 = vpow.pop %v1399
  %v1401 = vadd.f32 %v1400, 1.0
  %v1402 = vrcp.pop %v1401
  %v1403 = vmul.f32 1.0, %v1402
  %v1404 = vxor.u32 %v1395, 2147483648
  %v1405 = vmul.f32 %v1404, 1.442695
  %v1406 = vpow.pop %v1405
  %v1407 = vadd.f32 %v1406, 1.0
  %v1408 = vrcp.pop %v1407
  %v1409 = vmul.f32 1.0, %v1408
  %v1410 = vtanh.pop %v1396
  %v1411 = vxor.u32 %v1397, 2147483648
  %v1412 = vmul.f32 %v1411, 1.442695
  %v1413 = vpow.pop %v1412
  %v1414 = vadd.f32 %v1413, 1.0
  %v1415 = vrcp.pop %v1414
  %v1416 = vmul.f32 1.0, %v1415
  %v1417 = vmul.f32 %v1409, %v1148
  %v1418 = vmul.f32 %v1403, %v1410
  %v1419 = vadd.f32 %v1417, %v1418
  %v1420 = vtanh.pop %v1419
  %v1421 = vmul.f32 %v1416, %v1420
  %v1422 = vpack.c.bf16 %v1421, %v1150
  %v1423 = vld [vmem:[%s9] sm:$0xff]
  %v1424 = vld [vmem:[%s9 + $0x8] sm:$0xff]
  %v1425 = vld [vmem:[%s9 + $0x10] sm:$0xff]
  %v1426 = vld [vmem:[%s9 + $0x18] sm:$0xff]
  %v1427 = vld [vmem:[%s9 + $0x20] sm:$0xff]
  %v1428 = vld [vmem:[%s9 + $0x28] sm:$0xff]
  %v1429 = vld [vmem:[%s9 + $0x30] sm:$0xff]
  %v1430 = vld [vmem:[%s9 + $0x38] sm:$0xff]
  %v1431 = vld [vmem:[%s9 + $0x40] sm:$0xff]
  %v1432 = vld [vmem:[%s9 + $0x48] sm:$0xff]
  %v1433 = vld [vmem:[%s9 + $0x50] sm:$0xff]
  %v1434 = vld [vmem:[%s9 + $0x58] sm:$0xff]
  %v1435 = vld [vmem:[%s9 + $0x60] sm:$0xff]
  %v1436 = vld [vmem:[%s9 + $0x68] sm:$0xff]
  %v1437 = vld [vmem:[%s9 + $0x70] sm:$0xff]
  %v1438 = vld [vmem:[%s9 + $0x78] sm:$0xff]
  %v1439 = vld [vmem:[%s9 + $0x80] sm:$0xff]
  %v1440 = vld [vmem:[%s9 + $0x88] sm:$0xff]
  %v1441 = vld [vmem:[%s9 + $0x90] sm:$0xff]
  %v1442 = vld [vmem:[%s9 + $0x98] sm:$0xff]
  %v1443 = vld [vmem:[%s9 + $0xa0] sm:$0xff]
  %v1444 = vld [vmem:[%s9 + $0xa8] sm:$0xff]
  %v1445 = vld [vmem:[%s9 + $0xb0] sm:$0xff]
  %v1446 = vld [vmem:[%s9 + $0xb8] sm:$0xff]
  %v1447 = vld [vmem:[%s9 + $0xc0] sm:$0xff]
  %v1448 = vld [vmem:[%s9 + $0xc8] sm:$0xff]
  %v1449 = vld [vmem:[%s9 + $0xd0] sm:$0xff]
  %v1450 = vld [vmem:[%s9 + $0xd8] sm:$0xff]
  %v1451 = vld [vmem:[%s9 + $0xe0] sm:$0xff]
  %v1452 = vld [vmem:[%s9 + $0xe8] sm:$0xff]
  %v1453 = vld [vmem:[%s9 + $0xf0] sm:$0xff]
  %v1454 = vld [vmem:[%s9 + $0xf8] sm:$0xff]
  %v1455 = vld [vmem:[%s11] sm:$0xf]
  %v1457 = vlaneseq
  %v1458 = vshrl.u32 %v1457, 7
  %v1459 = vsub.s32 0, %v1458
  %v1460 = vrot.slane %v1455, %v1459
  %v1461 = vlaneseq
  %v1462 = vshrl.u32 %v1461, 7
  %v1463 = vsub.s32 1, %v1462
  %v1464 = vrot.slane %v1455, %v1463
  %v1465 = vlaneseq
  %v1466 = vshrl.u32 %v1465, 7
  %v1467 = vsub.s32 2, %v1466
  %v1468 = vrot.slane %v1455, %v1467
  %v1469 = vlaneseq
  %v1470 = vshrl.u32 %v1469, 7
  %v1471 = vsub.s32 3, %v1470
  %v1472 = vrot.slane %v1455, %v1471
  %v1509 = vunpack.c.l.b16 %v1423
  %v1510 = vunpack.c.h.b16 %v1423
  %v1511 = vunpack.c.l.b16 %v1424
  %v1512 = vunpack.c.h.b16 %v1424
  %v1513 = vunpack.c.l.b16 %v1425
  %v1514 = vunpack.c.h.b16 %v1425
  %v1515 = vunpack.c.l.b16 %v1426
  %v1516 = vunpack.c.h.b16 %v1426
  %v1517 = vunpack.c.l.b16 %v1427
  %v1518 = vunpack.c.h.b16 %v1427
  %v1519 = vunpack.c.l.b16 %v1428
  %v1520 = vunpack.c.h.b16 %v1428
  %v1521 = vunpack.c.l.b16 %v1429
  %v1522 = vunpack.c.h.b16 %v1429
  %v1523 = vunpack.c.l.b16 %v1430
  %v1524 = vunpack.c.h.b16 %v1430
  %v1525 = vunpack.c.l.b16 %v1431
  %v1526 = vunpack.c.h.b16 %v1431
  %v1527 = vunpack.c.l.b16 %v1432
  %v1528 = vunpack.c.h.b16 %v1432
  %v1529 = vunpack.c.l.b16 %v1433
  %v1530 = vunpack.c.h.b16 %v1433
  %v1531 = vunpack.c.l.b16 %v1434
  %v1532 = vunpack.c.h.b16 %v1434
  %v1533 = vunpack.c.l.b16 %v1435
  %v1534 = vunpack.c.h.b16 %v1435
  %v1535 = vunpack.c.l.b16 %v1436
  %v1536 = vunpack.c.h.b16 %v1436
  %v1537 = vunpack.c.l.b16 %v1437
  %v1538 = vunpack.c.h.b16 %v1437
  %v1539 = vunpack.c.l.b16 %v1438
  %v1540 = vunpack.c.h.b16 %v1438
  %v1541 = vunpack.c.l.b16 %v1439
  %v1542 = vunpack.c.h.b16 %v1439
  %v1543 = vunpack.c.l.b16 %v1440
  %v1544 = vunpack.c.h.b16 %v1440
  %v1545 = vunpack.c.l.b16 %v1441
  %v1546 = vunpack.c.h.b16 %v1441
  %v1547 = vunpack.c.l.b16 %v1442
  %v1548 = vunpack.c.h.b16 %v1442
  %v1549 = vunpack.c.l.b16 %v1443
  %v1550 = vunpack.c.h.b16 %v1443
  %v1551 = vunpack.c.l.b16 %v1444
  %v1552 = vunpack.c.h.b16 %v1444
  %v1553 = vunpack.c.l.b16 %v1445
  %v1554 = vunpack.c.h.b16 %v1445
  %v1555 = vunpack.c.l.b16 %v1446
  %v1556 = vunpack.c.h.b16 %v1446
  %v1557 = vunpack.c.l.b16 %v1447
  %v1558 = vunpack.c.h.b16 %v1447
  %v1559 = vunpack.c.l.b16 %v1448
  %v1560 = vunpack.c.h.b16 %v1448
  %v1561 = vunpack.c.l.b16 %v1449
  %v1562 = vunpack.c.h.b16 %v1449
  %v1563 = vunpack.c.l.b16 %v1450
  %v1564 = vunpack.c.h.b16 %v1450
  %v1565 = vunpack.c.l.b16 %v1451
  %v1566 = vunpack.c.h.b16 %v1451
  %v1567 = vunpack.c.l.b16 %v1452
  %v1568 = vunpack.c.h.b16 %v1452
  %v1569 = vunpack.c.l.b16 %v1453
  %v1570 = vunpack.c.h.b16 %v1453
  %v1571 = vunpack.c.l.b16 %v1454
  %v1572 = vunpack.c.h.b16 %v1454
  %v1573 = vpack.c.b16 %v1513, %v1509
  %v1574 = vpack.c.b16 %v1514, %v1510
  %v1575 = vpack.c.b16 %v1515, %v1511
  %v1576 = vpack.c.b16 %v1516, %v1512
  %v1577 = vpack.c.b16 %v1521, %v1517
  %v1578 = vpack.c.b16 %v1522, %v1518
  %v1579 = vpack.c.b16 %v1523, %v1519
  %v1580 = vpack.c.b16 %v1524, %v1520
  %v1581 = vpack.c.b16 %v1529, %v1525
  %v1582 = vpack.c.b16 %v1530, %v1526
  %v1583 = vpack.c.b16 %v1531, %v1527
  %v1584 = vpack.c.b16 %v1532, %v1528
  %v1585 = vpack.c.b16 %v1537, %v1533
  %v1586 = vpack.c.b16 %v1538, %v1534
  %v1587 = vpack.c.b16 %v1539, %v1535
  %v1588 = vpack.c.b16 %v1540, %v1536
  %v1589 = vpack.c.b16 %v1545, %v1541
  %v1590 = vpack.c.b16 %v1546, %v1542
  %v1591 = vpack.c.b16 %v1547, %v1543
  %v1592 = vpack.c.b16 %v1548, %v1544
  %v1593 = vpack.c.b16 %v1553, %v1549
  %v1594 = vpack.c.b16 %v1554, %v1550
  %v1595 = vpack.c.b16 %v1555, %v1551
  %v1596 = vpack.c.b16 %v1556, %v1552
  %v1597 = vpack.c.b16 %v1561, %v1557
  %v1598 = vpack.c.b16 %v1562, %v1558
  %v1599 = vpack.c.b16 %v1563, %v1559
  %v1600 = vpack.c.b16 %v1564, %v1560
  %v1601 = vpack.c.b16 %v1569, %v1565
  %v1602 = vpack.c.b16 %v1570, %v1566
  %v1603 = vpack.c.b16 %v1571, %v1567
  %v1604 = vpack.c.b16 %v1572, %v1568
  %1637 = vmatprep.subr.bf16.mxu0 %v1602
  %1638 = vmatpush1.bf16.msra.mxu0 %v1601
  %1639 = vmatprep.subr.bf16.mxu0 %v1598
  %1640 = vmatpush1.bf16.msra.mxu0 %v1597
  %1641 = vmatprep.subr.bf16.mxu0 %v1594
  %1642 = vmatpush1.bf16.msra.mxu0 %v1593
  %1643 = vmatprep.subr.bf16.mxu0 %v1590
  %1644 = vmatpush1.bf16.msra.mxu0 %v1589
  %1645 = vmatprep.subr.bf16.mxu0 %v1586
  %1646 = vmatpush1.bf16.msra.mxu0 %v1585
  %1647 = vmatprep.subr.bf16.mxu0 %v1582
  %1648 = vmatpush1.bf16.msra.mxu0 %v1581
  %1649 = vmatprep.subr.bf16.mxu0 %v1578
  %1650 = vmatpush1.bf16.msra.mxu0 %v1577
  %1651 = vmatprep.subr.bf16.mxu0 %v1574
  %1652 = vmatpush1.bf16.msra.mxu0 %v1573
  %1653 = vmatprep.subr.bf16.mxu0 0
  %1654 = vmatpush2.bf16.msra.mxu0 0
  %1655 = vmatprep.subr.bf16.mxu0 0
  %1656 = vmatpush2.bf16.msra.mxu0 0
  %1657 = vmatprep.subr.bf16.mxu0 0
  %1658 = vmatpush2.bf16.msra.mxu0 0
  %1659 = vmatprep.subr.bf16.mxu0 0
  %1660 = vmatpush2.bf16.msra.mxu0 0
  %1661 = vmatprep.subr.bf16.mxu0 0
  %1662 = vmatpush2.bf16.msra.mxu0 0
  %1663 = vmatprep.subr.bf16.mxu0 0
  %1664 = vmatpush2.bf16.msra.mxu0 0
  %1665 = vmatprep.subr.bf16.mxu0 0
  %1666 = vmatpush2.bf16.msra.mxu0 0
  %1667 = vmatprep.subr.bf16.mxu0 0
  %1668 = vmatpush2.bf16.msra.mxu0 0
  %1669 = vmatprep.mubr.bf16.mxu0 0
  %1670 = vmatmul.mubr.bf16.gmra.mxu0 %v1422
  %v1671 = vpop.f32.mrf.mxu0
  %v1672 = vadd.f32 %v1460, %v1671
  %v1673 = vpop.f32.mrf.mxu0
  %v1674 = vpop.f32.mrf.mxu0
  %v1675 = vadd.f32 %v1460, %v1674
  %v1676 = vpop.f32.mrf.mxu0
  %v1677 = vadd.f32 %v1464, %v1676
  %1678 = vdwg.mxu0
  %1679 = vmatprep.subr.bf16.mxu0 %v1604
  %1680 = vmatpush1.bf16.msra.mxu0 %v1603
  %1681 = vmatprep.subr.bf16.mxu0 %v1600
  %1682 = vmatpush1.bf16.msra.mxu0 %v1599
  %1683 = vmatprep.subr.bf16.mxu0 %v1596
  %1684 = vmatpush1.bf16.msra.mxu0 %v1595
  %1685 = vmatprep.subr.bf16.mxu0 %v1592
  %1686 = vmatpush1.bf16.msra.mxu0 %v1591
  %1687 = vmatprep.subr.bf16.mxu0 %v1588
  %1688 = vmatpush1.bf16.msra.mxu0 %v1587
  %1689 = vmatprep.subr.bf16.mxu0 %v1584
  %1690 = vmatpush1.bf16.msra.mxu0 %v1583
  %1691 = vmatprep.subr.bf16.mxu0 %v1580
  %1692 = vmatpush1.bf16.msra.mxu0 %v1579
  %1693 = vmatprep.subr.bf16.mxu0 %v1576
  %1694 = vmatpush1.bf16.msra.mxu0 %v1575
  %1695 = vmatprep.subr.bf16.mxu0 0
  %1696 = vmatpush2.bf16.msra.mxu0 0
  %1697 = vmatprep.subr.bf16.mxu0 0
  %1698 = vmatpush2.bf16.msra.mxu0 0
  %1699 = vmatprep.subr.bf16.mxu0 0
  %1700 = vmatpush2.bf16.msra.mxu0 0
  %1701 = vmatprep.subr.bf16.mxu0 0
  %1702 = vmatpush2.bf16.msra.mxu0 0
  %1703 = vmatprep.subr.bf16.mxu0 0
  %1704 = vmatpush2.bf16.msra.mxu0 0
  %1705 = vmatprep.subr.bf16.mxu0 0
  %1706 = vmatpush2.bf16.msra.mxu0 0
  %1707 = vmatprep.subr.bf16.mxu0 0
  %1708 = vmatpush2.bf16.msra.mxu0 0
  %1709 = vmatprep.subr.bf16.mxu0 0
  %1710 = vmatpush2.bf16.msra.mxu0 0
  %1711 = vmatprep.mubr.bf16.mxu0 0
  %1712 = vmatmul.mubr.bf16.gmra.mxu0 %v1422
  %v1713 = vpop.f32.mrf.mxu0
  %v1714 = vadd.f32 %v1468, %v1713
  %v1715 = vpop.f32.mrf.mxu0
  %v1716 = vadd.f32 %v1472, %v1715
  %v1717 = vpop.f32.mrf.mxu0
  %v1718 = vadd.f32 %v1468, %v1717
  %v1719 = vpop.f32.mrf.mxu0
  %v1720 = vadd.f32 %v1472, %v1719
  %1721 = vdwg.mxu0
  %v1722 = vld [vmem:[%s10] sm:$0xff]
  %v1723 = vld [vmem:[%s10 + $0x8] sm:$0xff]
  %v1724 = vld [vmem:[%s10 + $0x10] sm:$0xff]
  %v1725 = vld [vmem:[%s10 + $0x18] sm:$0xff]
  %v1726 = vld [vmem:[%s10 + $0x20] sm:$0xff]
  %v1727 = vld [vmem:[%s10 + $0x28] sm:$0xff]
  %v1728 = vld [vmem:[%s10 + $0x30] sm:$0xff]
  %v1729 = vld [vmem:[%s10 + $0x38] sm:$0xff]
  %v1730 = vld [vmem:[%s10 + $0x40] sm:$0xff]
  %v1731 = vld [vmem:[%s10 + $0x48] sm:$0xff]
  %v1732 = vld [vmem:[%s10 + $0x50] sm:$0xff]
  %v1733 = vld [vmem:[%s10 + $0x58] sm:$0xff]
  %v1734 = vld [vmem:[%s10 + $0x60] sm:$0xff]
  %v1735 = vld [vmem:[%s10 + $0x68] sm:$0xff]
  %v1736 = vld [vmem:[%s10 + $0x70] sm:$0xff]
  %v1737 = vld [vmem:[%s10 + $0x78] sm:$0xff]
  %v1738 = vld [vmem:[%s10 + $0x80] sm:$0xff]
  %v1739 = vld [vmem:[%s10 + $0x88] sm:$0xff]
  %v1740 = vld [vmem:[%s10 + $0x90] sm:$0xff]
  %v1741 = vld [vmem:[%s10 + $0x98] sm:$0xff]
  %v1742 = vld [vmem:[%s10 + $0xa0] sm:$0xff]
  %v1743 = vld [vmem:[%s10 + $0xa8] sm:$0xff]
  %v1744 = vld [vmem:[%s10 + $0xb0] sm:$0xff]
  %v1745 = vld [vmem:[%s10 + $0xb8] sm:$0xff]
  %v1746 = vld [vmem:[%s10 + $0xc0] sm:$0xff]
  %v1747 = vld [vmem:[%s10 + $0xc8] sm:$0xff]
  %v1748 = vld [vmem:[%s10 + $0xd0] sm:$0xff]
  %v1749 = vld [vmem:[%s10 + $0xd8] sm:$0xff]
  %v1750 = vld [vmem:[%s10 + $0xe0] sm:$0xff]
  %v1751 = vld [vmem:[%s10 + $0xe8] sm:$0xff]
  %v1752 = vld [vmem:[%s10 + $0xf0] sm:$0xff]
  %v1753 = vld [vmem:[%s10 + $0xf8] sm:$0xff]
  %v1754 = vxor.u32 %v1672, 2147483648
  %v1755 = vmul.f32 %v1754, 1.442695
  %v1756 = vpow.pop %v1755
  %v1757 = vadd.f32 %v1756, 1.0
  %v1758 = vrcp.pop %v1757
  %v1759 = vmul.f32 1.0, %v1758
  %v1760 = vtanh.pop %v1714
  %v1761 = vxor.u32 %v1716, 2147483648
  %v1762 = vmul.f32 %v1761, 1.442695
  %v1763 = vpow.pop %v1762
  %v1764 = vadd.f32 %v1763, 1.0
  %v1765 = vrcp.pop %v1764
  %v1766 = vmul.f32 1.0, %v1765
  %v1767 = vmul.f32 %v1759, %v1760
  %v1768 = vtanh.pop %v1767
  %v1769 = vmul.f32 %v1766, %v1768
  %v1770 = vpack.c.bf16 %v1769, %v1769
  %v1803 = vunpack.c.l.b16 %v1722
  %v1804 = vunpack.c.h.b16 %v1722
  %v1805 = vunpack.c.l.b16 %v1723
  %v1806 = vunpack.c.h.b16 %v1723
  %v1807 = vunpack.c.l.b16 %v1724
  %v1808 = vunpack.c.h.b16 %v1724
  %v1809 = vunpack.c.l.b16 %v1725
  %v1810 = vunpack.c.h.b16 %v1725
  %v1811 = vunpack.c.l.b16 %v1726
  %v1812 = vunpack.c.h.b16 %v1726
  %v1813 = vunpack.c.l.b16 %v1727
  %v1814 = vunpack.c.h.b16 %v1727
  %v1815 = vunpack.c.l.b16 %v1728
  %v1816 = vunpack.c.h.b16 %v1728
  %v1817 = vunpack.c.l.b16 %v1729
  %v1818 = vunpack.c.h.b16 %v1729
  %v1819 = vunpack.c.l.b16 %v1730
  %v1820 = vunpack.c.h.b16 %v1730
  %v1821 = vunpack.c.l.b16 %v1731
  %v1822 = vunpack.c.h.b16 %v1731
  %v1823 = vunpack.c.l.b16 %v1732
  %v1824 = vunpack.c.h.b16 %v1732
  %v1825 = vunpack.c.l.b16 %v1733
  %v1826 = vunpack.c.h.b16 %v1733
  %v1827 = vunpack.c.l.b16 %v1734
  %v1828 = vunpack.c.h.b16 %v1734
  %v1829 = vunpack.c.l.b16 %v1735
  %v1830 = vunpack.c.h.b16 %v1735
  %v1831 = vunpack.c.l.b16 %v1736
  %v1832 = vunpack.c.h.b16 %v1736
  %v1833 = vunpack.c.l.b16 %v1737
  %v1834 = vunpack.c.h.b16 %v1737
  %v1835 = vunpack.c.l.b16 %v1738
  %v1836 = vunpack.c.h.b16 %v1738
  %v1837 = vunpack.c.l.b16 %v1739
  %v1838 = vunpack.c.h.b16 %v1739
  %v1839 = vunpack.c.l.b16 %v1740
  %v1840 = vunpack.c.h.b16 %v1740
  %v1841 = vunpack.c.l.b16 %v1741
  %v1842 = vunpack.c.h.b16 %v1741
  %v1843 = vunpack.c.l.b16 %v1742
  %v1844 = vunpack.c.h.b16 %v1742
  %v1845 = vunpack.c.l.b16 %v1743
  %v1846 = vunpack.c.h.b16 %v1743
  %v1847 = vunpack.c.l.b16 %v1744
  %v1848 = vunpack.c.h.b16 %v1744
  %v1849 = vunpack.c.l.b16 %v1745
  %v1850 = vunpack.c.h.b16 %v1745
  %v1851 = vunpack.c.l.b16 %v1746
  %v1852 = vunpack.c.h.b16 %v1746
  %v1853 = vunpack.c.l.b16 %v1747
  %v1854 = vunpack.c.h.b16 %v1747
  %v1855 = vunpack.c.l.b16 %v1748
  %v1856 = vunpack.c.h.b16 %v1748
  %v1857 = vunpack.c.l.b16 %v1749
  %v1858 = vunpack.c.h.b16 %v1749
  %v1859 = vunpack.c.l.b16 %v1750
  %v1860 = vunpack.c.h.b16 %v1750
  %v1861 = vunpack.c.l.b16 %v1751
  %v1862 = vunpack.c.h.b16 %v1751
  %v1863 = vunpack.c.l.b16 %v1752
  %v1864 = vunpack.c.h.b16 %v1752
  %v1865 = vunpack.c.l.b16 %v1753
  %v1866 = vunpack.c.h.b16 %v1753
  %v1867 = vpack.c.b16 %v1807, %v1803
  %v1868 = vpack.c.b16 %v1808, %v1804
  %v1869 = vpack.c.b16 %v1809, %v1805
  %v1870 = vpack.c.b16 %v1810, %v1806
  %v1871 = vpack.c.b16 %v1815, %v1811
  %v1872 = vpack.c.b16 %v1816, %v1812
  %v1873 = vpack.c.b16 %v1817, %v1813
  %v1874 = vpack.c.b16 %v1818, %v1814
  %v1875 = vpack.c.b16 %v1823, %v1819
  %v1876 = vpack.c.b16 %v1824, %v1820
  %v1877 = vpack.c.b16 %v1825, %v1821
  %v1878 = vpack.c.b16 %v1826, %v1822
  %v1879 = vpack.c.b16 %v1831, %v1827
  %v1880 = vpack.c.b16 %v1832, %v1828
  %v1881 = vpack.c.b16 %v1833, %v1829
  %v1882 = vpack.c.b16 %v1834, %v1830
  %v1883 = vpack.c.b16 %v1839, %v1835
  %v1884 = vpack.c.b16 %v1840, %v1836
  %v1885 = vpack.c.b16 %v1841, %v1837
  %v1886 = vpack.c.b16 %v1842, %v1838
  %v1887 = vpack.c.b16 %v1847, %v1843
  %v1888 = vpack.c.b16 %v1848, %v1844
  %v1889 = vpack.c.b16 %v1849, %v1845
  %v1890 = vpack.c.b16 %v1850, %v1846
  %v1891 = vpack.c.b16 %v1855, %v1851
  %v1892 = vpack.c.b16 %v1856, %v1852
  %v1893 = vpack.c.b16 %v1857, %v1853
  %v1894 = vpack.c.b16 %v1858, %v1854
  %v1895 = vpack.c.b16 %v1863, %v1859
  %v1896 = vpack.c.b16 %v1864, %v1860
  %v1897 = vpack.c.b16 %v1865, %v1861
  %v1898 = vpack.c.b16 %v1866, %v1862
  %1931 = vmatprep.subr.bf16.mxu0 %v1896
  %1932 = vmatpush1.bf16.msra.mxu0 %v1895
  %1933 = vmatprep.subr.bf16.mxu0 %v1892
  %1934 = vmatpush1.bf16.msra.mxu0 %v1891
  %1935 = vmatprep.subr.bf16.mxu0 %v1888
  %1936 = vmatpush1.bf16.msra.mxu0 %v1887
  %1937 = vmatprep.subr.bf16.mxu0 %v1884
  %1938 = vmatpush1.bf16.msra.mxu0 %v1883
  %1939 = vmatprep.subr.bf16.mxu0 %v1880
  %1940 = vmatpush1.bf16.msra.mxu0 %v1879
  %1941 = vmatprep.subr.bf16.mxu0 %v1876
  %1942 = vmatpush1.bf16.msra.mxu0 %v1875
  %1943 = vmatprep.subr.bf16.mxu0 %v1872
  %1944 = vmatpush1.bf16.msra.mxu0 %v1871
  %1945 = vmatprep.subr.bf16.mxu0 %v1868
  %1946 = vmatpush1.bf16.msra.mxu0 %v1867
  %1947 = vmatprep.subr.bf16.mxu0 0
  %1948 = vmatpush2.bf16.msra.mxu0 0
  %1949 = vmatprep.subr.bf16.mxu0 0
  %1950 = vmatpush2.bf16.msra.mxu0 0
  %1951 = vmatprep.subr.bf16.mxu0 0
  %1952 = vmatpush2.bf16.msra.mxu0 0
  %1953 = vmatprep.subr.bf16.mxu0 0
  %1954 = vmatpush2.bf16.msra.mxu0 0
  %1955 = vmatprep.subr.bf16.mxu0 0
  %1956 = vmatpush2.bf16.msra.mxu0 0
  %1957 = vmatprep.subr.bf16.mxu0 0
  %1958 = vmatpush2.bf16.msra.mxu0 0
  %1959 = vmatprep.subr.bf16.mxu0 0
  %1960 = vmatpush2.bf16.msra.mxu0 0
  %1961 = vmatprep.subr.bf16.mxu0 0
  %1962 = vmatpush2.bf16.msra.mxu0 0
  %1963 = vmatprep.mubr.bf16.mxu0 0
  %1964 = vmatmul.mubr.bf16.gmra.mxu0 %v1770
  %v1965 = vpop.f32.mrf.mxu0
  %v1966 = vadd.f32 0.0, %v1965
  %v1967 = vpop.f32.mrf.mxu0
  %v1968 = vadd.f32 0.0, %v1967
  %v1969 = vpop.f32.mrf.mxu0
  %v1970 = vpop.f32.mrf.mxu0
  %1971 = vdwg.mxu0
  %1972 = vmatprep.subr.bf16.mxu0 %v1898
  %1973 = vmatpush1.bf16.msra.mxu0 %v1897
  %1974 = vmatprep.subr.bf16.mxu0 %v1894
  %1975 = vmatpush1.bf16.msra.mxu0 %v1893
  %1976 = vmatprep.subr.bf16.mxu0 %v1890
  %1977 = vmatpush1.bf16.msra.mxu0 %v1889
  %1978 = vmatprep.subr.bf16.mxu0 %v1886
  %1979 = vmatpush1.bf16.msra.mxu0 %v1885
  %1980 = vmatprep.subr.bf16.mxu0 %v1882
  %1981 = vmatpush1.bf16.msra.mxu0 %v1881
  %1982 = vmatprep.subr.bf16.mxu0 %v1878
  %1983 = vmatpush1.bf16.msra.mxu0 %v1877
  %1984 = vmatprep.subr.bf16.mxu0 %v1874
  %1985 = vmatpush1.bf16.msra.mxu0 %v1873
  %1986 = vmatprep.subr.bf16.mxu0 %v1870
  %1987 = vmatpush1.bf16.msra.mxu0 %v1869
  %1988 = vmatprep.subr.bf16.mxu0 0
  %1989 = vmatpush2.bf16.msra.mxu0 0
  %1990 = vmatprep.subr.bf16.mxu0 0
  %1991 = vmatpush2.bf16.msra.mxu0 0
  %1992 = vmatprep.subr.bf16.mxu0 0
  %1993 = vmatpush2.bf16.msra.mxu0 0
  %1994 = vmatprep.subr.bf16.mxu0 0
  %1995 = vmatpush2.bf16.msra.mxu0 0
  %1996 = vmatprep.subr.bf16.mxu0 0
  %1997 = vmatpush2.bf16.msra.mxu0 0
  %1998 = vmatprep.subr.bf16.mxu0 0
  %1999 = vmatpush2.bf16.msra.mxu0 0
  %2000 = vmatprep.subr.bf16.mxu0 0
  %2001 = vmatpush2.bf16.msra.mxu0 0
  %2002 = vmatprep.subr.bf16.mxu0 0
  %2003 = vmatpush2.bf16.msra.mxu0 0
  %2004 = vmatprep.mubr.bf16.mxu0 0
  %2005 = vmatmul.mubr.bf16.gmra.mxu0 %v1770
  %v2006 = vpop.f32.mrf.mxu0
  %v2007 = vadd.f32 0.0, %v2006
  %v2008 = vpop.f32.mrf.mxu0
  %v2009 = vadd.f32 0.0, %v2008
  %v2010 = vpop.f32.mrf.mxu0
  %v2011 = vpop.f32.mrf.mxu0
  %2012 = vdwg.mxu0
  %v2013 = vadd.f32 %v1675, %v1966
  %v2014 = vadd.f32 %v1677, %v1968
  %v2015 = vadd.f32 %v1718, %v2007
  %v2016 = vadd.f32 %v1720, %v2009
  %v2017 = vxor.u32 %v2013, 2147483648
  %v2018 = vmul.f32 %v2017, 1.442695
  %v2019 = vpow.pop %v2018
  %v2020 = vadd.f32 %v2019, 1.0
  %v2021 = vrcp.pop %v2020
  %v2022 = vmul.f32 1.0, %v2021
  %v2023 = vxor.u32 %v2014, 2147483648
  %v2024 = vmul.f32 %v2023, 1.442695
  %v2025 = vpow.pop %v2024
  %v2026 = vadd.f32 %v2025, 1.0
  %v2027 = vrcp.pop %v2026
  %v2028 = vmul.f32 1.0, %v2027
  %v2029 = vtanh.pop %v2015
  %v2030 = vxor.u32 %v2016, 2147483648
  %v2031 = vmul.f32 %v2030, 1.442695
  %v2032 = vpow.pop %v2031
  %v2033 = vadd.f32 %v2032, 1.0
  %v2034 = vrcp.pop %v2033
  %v2035 = vmul.f32 1.0, %v2034
  %v2036 = vmul.f32 %v2028, %v1767
  %v2037 = vmul.f32 %v2022, %v2029
  %v2038 = vadd.f32 %v2036, %v2037
  %v2039 = vtanh.pop %v2038
  %v2040 = vmul.f32 %v2035, %v2039
  %v2041 = vlaneseq
  %v2042 = vshrl.u32 %v2041, 7
  %v2043 = vsub.s32 0, %v2042
  %v2044 = vrot.slane %v937, %v2043
  %v2045 = vadd.f32 %v1769, %v2044
  %v2046 = vpack.c.bf16 %v2045, %v2045
  %v2047 = vld [vmem:[%s12] sm:$0xf]
  %v2048 = vld [vmem:[%s12 + $0x4] sm:$0xf]
  %v2049 = vld [vmem:[%s12 + $0x8] sm:$0xf]
  %v2050 = vld [vmem:[%s12 + $0xc] sm:$0xf]
  %v2051 = vld [vmem:[%s12 + $0x10] sm:$0xf]
  %v2052 = vld [vmem:[%s12 + $0x14] sm:$0xf]
  %v2053 = vld [vmem:[%s12 + $0x18] sm:$0xf]
  %v2054 = vld [vmem:[%s12 + $0x1c] sm:$0xf]
  %v2055 = vld [vmem:[%s12 + $0x20] sm:$0xf]
  %v2056 = vld [vmem:[%s12 + $0x24] sm:$0xf]
  %v2057 = vld [vmem:[%s12 + $0x28] sm:$0xf]
  %v2058 = vld [vmem:[%s12 + $0x2c] sm:$0xf]
  %v2059 = vld [vmem:[%s12 + $0x30] sm:$0xf]
  %v2060 = vld [vmem:[%s12 + $0x34] sm:$0xf]
  %v2061 = vld [vmem:[%s12 + $0x38] sm:$0xf]
  %v2062 = vld [vmem:[%s12 + $0x3c] sm:$0xf]
  %v2063 = vld [vmem:[%s13] sm:$0x1]
  %v2065 = vlaneseq
  %v2066 = vshrl.u32 %v2065, 7
  %v2067 = vsub.s32 0, %v2066
  %v2068 = vrot.slane %v2063, %v2067
  %v2086 = vunpack.c.l.b16 %v2047
  %v2087 = vunpack.c.l.b16 %v2048
  %v2088 = vunpack.c.l.b16 %v2049
  %v2089 = vunpack.c.l.b16 %v2050
  %v2090 = vunpack.c.l.b16 %v2051
  %v2091 = vunpack.c.l.b16 %v2052
  %v2092 = vunpack.c.l.b16 %v2053
  %v2093 = vunpack.c.l.b16 %v2054
  %v2094 = vunpack.c.l.b16 %v2055
  %v2095 = vunpack.c.l.b16 %v2056
  %v2096 = vunpack.c.l.b16 %v2057
  %v2097 = vunpack.c.l.b16 %v2058
  %v2098 = vunpack.c.l.b16 %v2059
  %v2099 = vunpack.c.l.b16 %v2060
  %v2100 = vunpack.c.l.b16 %v2061
  %v2101 = vunpack.c.l.b16 %v2062
  %v2102 = vpack.c.b16 %v2087, %v2086
  %v2103 = vpack.c.b16 %v2089, %v2088
  %v2104 = vpack.c.b16 %v2091, %v2090
  %v2105 = vpack.c.b16 %v2093, %v2092
  %v2106 = vpack.c.b16 %v2095, %v2094
  %v2107 = vpack.c.b16 %v2097, %v2096
  %v2108 = vpack.c.b16 %v2099, %v2098
  %v2109 = vpack.c.b16 %v2101, %v2100
  %2118 = vmatprep.subr.bf16.mxu0 0
  %2119 = vmatpush1.bf16.msra.mxu0 %v2109
  %2120 = vmatprep.subr.bf16.mxu0 0
  %2121 = vmatpush1.bf16.msra.mxu0 %v2108
  %2122 = vmatprep.subr.bf16.mxu0 0
  %2123 = vmatpush1.bf16.msra.mxu0 %v2107
  %2124 = vmatprep.subr.bf16.mxu0 0
  %2125 = vmatpush1.bf16.msra.mxu0 %v2106
  %2126 = vmatprep.subr.bf16.mxu0 0
  %2127 = vmatpush1.bf16.msra.mxu0 %v2105
  %2128 = vmatprep.subr.bf16.mxu0 0
  %2129 = vmatpush1.bf16.msra.mxu0 %v2104
  %2130 = vmatprep.subr.bf16.mxu0 0
  %2131 = vmatpush1.bf16.msra.mxu0 %v2103
  %2132 = vmatprep.subr.bf16.mxu0 0
  %2133 = vmatpush1.bf16.msra.mxu0 %v2102
  %2134 = vmatprep.subr.bf16.mxu0 0
  %2135 = vmatpush2.bf16.msra.mxu0 0
  %2136 = vmatprep.subr.bf16.mxu0 0
  %2137 = vmatpush2.bf16.msra.mxu0 0
  %2138 = vmatprep.subr.bf16.mxu0 0
  %2139 = vmatpush2.bf16.msra.mxu0 0
  %2140 = vmatprep.subr.bf16.mxu0 0
  %2141 = vmatpush2.bf16.msra.mxu0 0
  %2142 = vmatprep.subr.bf16.mxu0 0
  %2143 = vmatpush2.bf16.msra.mxu0 0
  %2144 = vmatprep.subr.bf16.mxu0 0
  %2145 = vmatpush2.bf16.msra.mxu0 0
  %2146 = vmatprep.subr.bf16.mxu0 0
  %2147 = vmatpush2.bf16.msra.mxu0 0
  %2148 = vmatprep.subr.bf16.mxu0 0
  %2149 = vmatpush2.bf16.msra.mxu0 0
  %2150 = vmatprep.mubr.bf16.mxu0 0
  %2151 = vmatmul.mubr.bf16.gmra.mxu0 %v2046
  %v2152 = vpop.f32.mrf.mxu0
  %v2153 = vadd.f32 %v2068, %v2152
  %v2154 = vpop.f32.mrf.mxu0
  %v2155 = vpop.f32.mrf.mxu0
  %v2156 = vpop.f32.mrf.mxu0
  %2157 = vdwg.mxu0
  %2158 = vst [vmem:[%s14] sm:$0xff] %v2153
  %v2159 = vlaneseq
  %v2160 = vshrl.u32 %v2159, 7
  %v2161 = vsub.s32 1, %v2160
  %v2162 = vrot.slane %v937, %v2161
  %v2163 = vadd.f32 %v2040, %v2162
  %v2164 = vpack.c.bf16 %v2163, %v2163
  %v2165 = vld [vmem:[%s12] sm:$0xf]
  %v2166 = vld [vmem:[%s12 + $0x4] sm:$0xf]
  %v2167 = vld [vmem:[%s12 + $0x8] sm:$0xf]
  %v2168 = vld [vmem:[%s12 + $0xc] sm:$0xf]
  %v2169 = vld [vmem:[%s12 + $0x10] sm:$0xf]
  %v2170 = vld [vmem:[%s12 + $0x14] sm:$0xf]
  %v2171 = vld [vmem:[%s12 + $0x18] sm:$0xf]
  %v2172 = vld [vmem:[%s12 + $0x1c] sm:$0xf]
  %v2173 = vld [vmem:[%s12 + $0x20] sm:$0xf]
  %v2174 = vld [vmem:[%s12 + $0x24] sm:$0xf]
  %v2175 = vld [vmem:[%s12 + $0x28] sm:$0xf]
  %v2176 = vld [vmem:[%s12 + $0x2c] sm:$0xf]
  %v2177 = vld [vmem:[%s12 + $0x30] sm:$0xf]
  %v2178 = vld [vmem:[%s12 + $0x34] sm:$0xf]
  %v2179 = vld [vmem:[%s12 + $0x38] sm:$0xf]
  %v2180 = vld [vmem:[%s12 + $0x3c] sm:$0xf]
  %v2181 = vld [vmem:[%s13] sm:$0x1]
  %v2183 = vlaneseq
  %v2184 = vshrl.u32 %v2183, 7
  %v2185 = vsub.s32 0, %v2184
  %v2186 = vrot.slane %v2181, %v2185
  %v2204 = vunpack.c.l.b16 %v2165
  %v2205 = vunpack.c.l.b16 %v2166
  %v2206 = vunpack.c.l.b16 %v2167
  %v2207 = vunpack.c.l.b16 %v2168
  %v2208 = vunpack.c.l.b16 %v2169
  %v2209 = vunpack.c.l.b16 %v2170
  %v2210 = vunpack.c.l.b16 %v2171
  %v2211 = vunpack.c.l.b16 %v2172
  %v2212 = vunpack.c.l.b16 %v2173
  %v2213 = vunpack.c.l.b16 %v2174
  %v2214 = vunpack.c.l.b16 %v2175
  %v2215 = vunpack.c.l.b16 %v2176
  %v2216 = vunpack.c.l.b16 %v2177
  %v2217 = vunpack.c.l.b16 %v2178
  %v2218 = vunpack.c.l.b16 %v2179
  %v2219 = vunpack.c.l.b16 %v2180
  %v2220 = vpack.c.b16 %v2205, %v2204
  %v2221 = vpack.c.b16 %v2207, %v2206
  %v2222 = vpack.c.b16 %v2209, %v2208
  %v2223 = vpack.c.b16 %v2211, %v2210
  %v2224 = vpack.c.b16 %v2213, %v2212
  %v2225 = vpack.c.b16 %v2215, %v2214
  %v2226 = vpack.c.b16 %v2217, %v2216
  %v2227 = vpack.c.b16 %v2219, %v2218
  %2236 = vmatprep.subr.bf16.mxu0 0
  %2237 = vmatpush1.bf16.msra.mxu0 %v2227
  %2238 = vmatprep.subr.bf16.mxu0 0
  %2239 = vmatpush1.bf16.msra.mxu0 %v2226
  %2240 = vmatprep.subr.bf16.mxu0 0
  %2241 = vmatpush1.bf16.msra.mxu0 %v2225
  %2242 = vmatprep.subr.bf16.mxu0 0
  %2243 = vmatpush1.bf16.msra.mxu0 %v2224
  %2244 = vmatprep.subr.bf16.mxu0 0
  %2245 = vmatpush1.bf16.msra.mxu0 %v2223
  %2246 = vmatprep.subr.bf16.mxu0 0
  %2247 = vmatpush1.bf16.msra.mxu0 %v2222
  %2248 = vmatprep.subr.bf16.mxu0 0
  %2249 = vmatpush1.bf16.msra.mxu0 %v2221
  %2250 = vmatprep.subr.bf16.mxu0 0
  %2251 = vmatpush1.bf16.msra.mxu0 %v2220
  %2252 = vmatprep.subr.bf16.mxu0 0
  %2253 = vmatpush2.bf16.msra.mxu0 0
  %2254 = vmatprep.subr.bf16.mxu0 0
  %2255 = vmatpush2.bf16.msra.mxu0 0
  %2256 = vmatprep.subr.bf16.mxu0 0
  %2257 = vmatpush2.bf16.msra.mxu0 0
  %2258 = vmatprep.subr.bf16.mxu0 0
  %2259 = vmatpush2.bf16.msra.mxu0 0
  %2260 = vmatprep.subr.bf16.mxu0 0
  %2261 = vmatpush2.bf16.msra.mxu0 0
  %2262 = vmatprep.subr.bf16.mxu0 0
  %2263 = vmatpush2.bf16.msra.mxu0 0
  %2264 = vmatprep.subr.bf16.mxu0 0
  %2265 = vmatpush2.bf16.msra.mxu0 0
  %2266 = vmatprep.subr.bf16.mxu0 0
  %2267 = vmatpush2.bf16.msra.mxu0 0
  %2268 = vmatprep.mubr.bf16.mxu0 0
  %2269 = vmatmul.mubr.bf16.gmra.mxu0 %v2164
  %v2270 = vpop.f32.mrf.mxu0
  %v2271 = vadd.f32 %v2186, %v2270
  %v2272 = vpop.f32.mrf.mxu0
  %v2273 = vpop.f32.mrf.mxu0
  %v2274 = vpop.f32.mrf.mxu0
  %2275 = vdwg.mxu0
  %2276 = vst [vmem:[%s14 + $0x8] sm:$0xff] %v2271
  // Predicated region
  $region58: #{image_captioner_forward.1} parent=0 // pred_check
    _
  $region59: #{image_captioner_forward.1} parent=0 // pred_check_branch
    %2278 = sbr.rel (0) target = $region61
  $region60: #{image_captioner_forward.1} parent=0 // pred_region
    _
  $region61: #{image_captioner_forward.1} parent=0 // pred_fallthru
    _
  // Predicated region
  $region62: #{image_captioner_forward.1} parent=0 // pred_check
    _
  $region63: #{image_captioner_forward.1} parent=0 // pred_check_branch
    %2280 = sbr.rel (0) target = $region65
  $region64: #{image_captioner_forward.1} parent=0 // pred_region
    _
  $region65: #{image_captioner_forward.1} parent=0 // pred_fallthru
    _

</llo_original>
